<compile_context>
chip_gen: v5e
topology: v5e:2x2
jax: 0.10.0
libtpu: 0.0.40
codegen_flags: <defaults>
</compile_context>

<pallas_src>
import functools
from math import ceil

import jax
import jax.numpy as jnp
from jax.experimental import pallas as pl
from jax.experimental.pallas import tpu as pltpu

LN_EPS = 1e-5                        # torch.nn.LayerNorm default
MATMUL_DTYPE = jnp.bfloat16          # MXU operand dtype (accumulation stays f32)
ATTN_VMEM_LIMIT = 48 * 1024 * 1024   # headroom under v7x's 64 MiB physical VMEM


# ----------------------------------------------------------------------------
# small helpers
# ----------------------------------------------------------------------------
def _ln(x, g, b):
    mean = jnp.mean(x, axis=-1, keepdims=True)
    var = jnp.mean(jnp.square(x - mean), axis=-1, keepdims=True)
    return (x - mean) * jax.lax.rsqrt(var + LN_EPS) * g + b


def _largest_divisor(n, cap):
    cap = max(1, min(n, cap))
    best = 1
    for c in range(1, cap + 1):
        if n % c == 0:
            best = c
    return best


def _row_tile(n, row_bytes, budget=8 << 20, max_rows=4096):
    """Largest multiple-of-8 divisor of n under a per-tile VMEM budget (or n itself)."""
    if n % 8 != 0:
        return n
    cap = max(8, min(n, max_rows, (budget // max(row_bytes, 1)) // 8 * 8))
    best = 8
    t = 8
    while t <= cap:
        if n % t == 0:
            best = t
        t += 8
    return best


# ----------------------------------------------------------------------------
# in-kernel batched multi-head attention (shared by both attention kernels)
# ----------------------------------------------------------------------------
def _mha(q3, k3, v3, wq, bq, wk, bk, wv, bv, wo, bo, *, heads, q_projected=False):
    """q3: (bb, lq, d); k3/v3: (bb, lk, d).  Each sub-batch attends only within itself
    (leading batch dim of the dot_generals) -> no mask, no cross-sub-batch FLOPs.
    Matmul operands bf16, accumulation & softmax in f32."""
    bb, lq, d = q3.shape
    lk = k3.shape[1]
    e = d // heads
    scale = 1.0 / float(e) ** 0.5
    md = MATMUL_DTYPE

    def proj(x3, w, b):
        x2 = x3.reshape(x3.shape[0] * x3.shape[1], d).astype(md)
        y = jnp.dot(x2, w.astype(md), preferred_element_type=jnp.float32) + b
        return y.reshape(x3.shape[0], x3.shape[1], d)

    q = q3.astype(jnp.float32) if q_projected else proj(q3, wq, bq)
    k = proj(k3, wk, bk)
    v = proj(v3, wv, bv)

    # Per-head attention, batched over the sub-batch dim (single-batch-dim dot_general
    # is the reliably-lowered Mosaic pattern; heads stay a small unrolled static loop).
    ctx = []
    for h in range(heads):
        sl = slice(h * e, (h + 1) * e)
        qh = q[:, :, sl].astype(md)
        kh = k[:, :, sl].astype(md)
        vh = v[:, :, sl].astype(md)
        s = jax.lax.dot_general(qh, kh, (((2,), (2,)), ((0,), (0,))),
                                preferred_element_type=jnp.float32)        # (bb, lq, lk)
        s = s * scale
        s = s - jnp.max(s, axis=-1, keepdims=True)
        p = jnp.exp(s)
        p = p * pl.reciprocal(jnp.sum(p, axis=-1, keepdims=True), approx=True)
        ctx.append(jax.lax.dot_general(p.astype(md), vh, (((2,), (1,)), ((0,), (0,))),
                                       preferred_element_type=jnp.float32))  # (bb, lq, e)
    ctx = jnp.concatenate(ctx, axis=-1) if heads > 1 else ctx[0]             # (bb, lq, d)
    out = jnp.dot(ctx.reshape(bb * lq, d).astype(md), wo.astype(md),
                  preferred_element_type=jnp.float32) + bo
    return out.reshape(bb, lq, d)


# ----------------------------------------------------------------------------
# Pallas kernels
# ----------------------------------------------------------------------------
def _time_attn_kernel(x_ref, wq, bq, wk, bk, wv, bv, wo, bo, o_ref, *, heads):
    x = x_ref[...]                                          # (tc, S, D)
    out = _mha(x, x, x, wq[...], bq[...], wk[...], bk[...], wv[...], bv[...],
               wo[...], bo[...], heads=heads)
    o_ref[...] = out.astype(o_ref.dtype)


def _dim_attn_kernel(send_ref, rq_ref,
                     s_wk, s_bk, s_wv, s_bv, s_wo, s_bo,
                     r_wq, r_bq, r_wk, r_bk, r_wv, r_bv, r_wo, r_bo,
                     o_ref, *, heads):
    """Fused dim_sender + dim_receiver; the router buffer lives only in VMEM."""
    send = send_ref[...]                                    # (sc, T, D)
    buf = _mha(rq_ref[...], send, send, None, None,
               s_wk[...], s_bk[...], s_wv[...], s_bv[...], s_wo[...], s_bo[...],
               heads=heads, q_projected=True)               # (sc, F, D), VMEM only
    recv = _mha(send, buf, buf,
                r_wq[...], r_bq[...], r_wk[...], r_bk[...], r_wv[...], r_bv[...],
                r_wo[...], r_bo[...], heads=heads)          # (sc, T, D)
    o_ref[...] = recv.astype(o_ref.dtype)


def _resid_mlp_kernel(x_ref, y_ref, g1, b1, w1, c1, w2, c2, g2, b2, o_ref):
    """z = LN1(x + y);  out = LN2(z + FC2(GELU(FC1(z))))   (dropout = identity)."""
    z = x_ref[...].astype(jnp.float32) + y_ref[...].astype(jnp.float32)
    z = _ln(z, g1[...], b1[...])
    h = jnp.dot(z.astype(MATMUL_DTYPE), w1[...].astype(MATMUL_DTYPE),
                preferred_element_type=jnp.float32) + c1[...]
    # TODO(synk): PyTorch nn.GELU defaults to erf; tanh approximation is used so the
    # nonlinearity maps onto the TPU EUP slot (~1e-3 abs difference).
    h = jax.nn.gelu(h, approximate=True)
    h = jnp.dot(h.astype(MATMUL_DTYPE), w2[...].astype(MATMUL_DTYPE),
                preferred_element_type=jnp.float32) + c2[...]
    o_ref[...] = _ln(z + h, g2[...], b2[...]).astype(o_ref.dtype)


def _merge_kernel(x_ref, g_ref, be_ref, w_ref, bl_ref, o_ref):
    """Fused LayerNorm(window*model_dim) + Linear(window*model_dim -> model_dim)."""
    xn = _ln(x_ref[...].astype(jnp.float32), g_ref[...], be_ref[...])
    y = jnp.dot(xn.astype(MATMUL_DTYPE), w_ref[...].astype(MATMUL_DTYPE),
                preferred_element_type=jnp.float32) + bl_ref[...]
    o_ref[...] = y.astype(o_ref.dtype)


# ----------------------------------------------------------------------------
# Pallas wrappers
# ----------------------------------------------------------------------------
def time_attention(p, x3, *, sub_budget=16 << 20):
    """Self-attention inside each sub-batch of x3: (n_sub, S, D) -> (n_sub, S, D)."""
    n, s, d = x3.shape
    heads = p["heads"]
    per_sub = 4 * (6 * s * d + 2 * s * s)           # rough f32 bytes / sub-batch / step
    cap = max(1, sub_budget // per_sub)
    if n > 1:
        cap = min(cap, n // 2)                      # >=2 grid steps (v7x megacore)
    tc = _largest_divisor(n, cap)
    grid = (n // tc,)

    row_map = lambda i: (i, 0, 0)
    cmap = lambda i: (0, 0)
    w_spec = pl.BlockSpec((d, d), cmap)
    b_spec = pl.BlockSpec((1, d), cmap)

    flops = 8 * n * s * d * d + 4 * n * s * s * d
    transc = heads * n * s * s
    bytes_acc = 4 * (2 * n * s * d + 4 * d * d + 4 * d)

    kernel = functools.partial(_time_attn_kernel, heads=heads)
    return pl.pallas_call(
        kernel,
        out_shape=jax.ShapeDtypeStruct((n, s, d), x3.dtype),
        grid=grid,
        in_specs=[pl.BlockSpec((tc, s, d), row_map),
                  w_spec, b_spec, w_spec, b_spec, w_spec, b_spec, w_spec, b_spec],
        out_specs=pl.BlockSpec((tc, s, d), row_map),
        compiler_params=pltpu.CompilerParams(
            dimension_semantics=("parallel",),
            vmem_limit_bytes=ATTN_VMEM_LIMIT),
        cost_estimate=pl.CostEstimate(flops=flops, transcendentals=transc,
                                      bytes_accessed=bytes_acc),
    )(x3, p["q"]["w"], p["q"]["b"], p["k"]["w"], p["k"]["b"],
      p["v"]["w"], p["v"]["b"], p["o"]["w"], p["o"]["b"])


def dim_attention(p_send, p_recv, router_q, send3, seg_num, *, sub_budget=12 << 20):
    """Fused router attention (dim_sender + dim_receiver) over (b*seg_num, T, D)."""
    n, t, d = send3.shape
    f = router_q.shape[1]
    heads = p_send["heads"]
    per_sub = 4 * (6 * t * d + 3 * f * d + 4 * t * f)
    cap = max(1, sub_budget // per_sub)
    if n > 1:
        cap = min(cap, max(1, n // 2))
    # chunk must divide seg_num so every block lines up with its router rows
    sc = _largest_divisor(seg_num, cap)
    grid = (n // sc,)
    nrb = seg_num // sc

    row_map = lambda i: (i, 0, 0)
    router_map = (lambda i: (0, 0, 0)) if nrb == 1 else (lambda i: (i % nrb, 0, 0))
    cmap = lambda i: (0, 0)
    w_spec = pl.BlockSpec((d, d), cmap)
    b_spec = pl.BlockSpec((1, d), cmap)

    flops = 6 * n * t * d * d + 6 * n * f * d * d + 8 * n * t * f * d
    transc = 2 * heads * n * t * f
    bytes_acc = 4 * (2 * n * t * d + seg_num * f * d + 14 * d * d)

    kernel = functools.partial(_dim_attn_kernel, heads=heads)
    return pl.pallas_call(
        kernel,
        out_shape=jax.ShapeDtypeStruct((n, t, d), send3.dtype),
        grid=grid,
        in_specs=[pl.BlockSpec((sc, t, d), row_map),
                  pl.BlockSpec((sc, f, d), router_map),
                  w_spec, b_spec, w_spec, b_spec, w_spec, b_spec,                    # sender k/v/o
                  w_spec, b_spec, w_spec, b_spec, w_spec, b_spec, w_spec, b_spec],   # receiver q/k/v/o
        out_specs=pl.BlockSpec((sc, t, d), row_map),
        compiler_params=pltpu.CompilerParams(
            dimension_semantics=("parallel",),
            vmem_limit_bytes=ATTN_VMEM_LIMIT),
        cost_estimate=pl.CostEstimate(flops=flops, transcendentals=transc,
                                      bytes_accessed=bytes_acc),
    )(send3, router_q,
      p_send["k"]["w"], p_send["k"]["b"], p_send["v"]["w"], p_send["v"]["b"],
      p_send["o"]["w"], p_send["o"]["b"],
      p_recv["q"]["w"], p_recv["q"]["b"], p_recv["k"]["w"], p_recv["k"]["b"],
      p_recv["v"]["w"], p_recv["v"]["b"], p_recv["o"]["w"], p_recv["o"]["b"])


def fused_resid_mlp(x2d, y2d, ln1, fc1, fc2, ln2):
    """norm2( norm1(x + y) + MLP(norm1(x + y)) ), row-tiled."""
    n, d = x2d.shape
    dff = fc1["w"].shape[1]
    tm = _row_tile(n, row_bytes=4 * (3 * d + 2 * dff))
    grid = (pl.cdiv(n, tm),)
    row_map = lambda i: (i, 0)
    cmap = lambda i: (0, 0)
    flops = 4 * n * d * dff + 12 * n * d
    bytes_acc = 4 * (3 * n * d + 2 * d * dff + dff + 5 * d)
    return pl.pallas_call(
        _resid_mlp_kernel,
        out_shape=jax.ShapeDtypeStruct((n, d), x2d.dtype),
        grid=grid,
        in_specs=[pl.BlockSpec((tm, d), row_map),
                  pl.BlockSpec((tm, d), row_map),
                  pl.BlockSpec((1, d), cmap), pl.BlockSpec((1, d), cmap),
                  pl.BlockSpec((d, dff), cmap), pl.BlockSpec((1, dff), cmap),
                  pl.BlockSpec((dff, d), cmap), pl.BlockSpec((1, d), cmap),
                  pl.BlockSpec((1, d), cmap), pl.BlockSpec((1, d), cmap)],
        out_specs=pl.BlockSpec((tm, d), row_map),
        compiler_params=pltpu.CompilerParams(dimension_semantics=("parallel",)),
        cost_estimate=pl.CostEstimate(flops=flops, transcendentals=2 * n * dff,
                                      bytes_accessed=bytes_acc),
    )(x2d, y2d, ln1["g"], ln1["b"], fc1["w"], fc1["b"],
      fc2["w"], fc2["b"], ln2["g"], ln2["b"])


def fused_merge(x2d, norm, lin):
    n, din = x2d.shape
    dout = lin["w"].shape[1]
    tm = _row_tile(n, row_bytes=4 * (2 * din + dout))
    grid = (pl.cdiv(n, tm),)
    row_map = lambda i: (i, 0)
    cmap = lambda i: (0, 0)
    return pl.pallas_call(
        _merge_kernel,
        out_shape=jax.ShapeDtypeStruct((n, dout), x2d.dtype),
        grid=grid,
        in_specs=[pl.BlockSpec((tm, din), row_map),
                  pl.BlockSpec((1, din), cmap), pl.BlockSpec((1, din), cmap),
                  pl.BlockSpec((din, dout), cmap), pl.BlockSpec((1, dout), cmap)],
        out_specs=pl.BlockSpec((tm, dout), row_map),
        compiler_params=pltpu.CompilerParams(dimension_semantics=("parallel",)),
        cost_estimate=pl.CostEstimate(flops=2 * n * din * dout + 8 * n * din,
                                      transcendentals=0,
                                      bytes_accessed=4 * (n * din + din * dout + n * dout)),
    )(x2d, norm["g"], norm["b"], lin["w"], lin["b"])


# ----------------------------------------------------------------------------
# Deterministic parameter initialisation (synthetic, no checkpoints)
# ----------------------------------------------------------------------------
def init_linear_params(key, din, dout, scale=0.02):
    kw, kb = jax.random.split(key)
    return {"w": scale * jax.random.normal(kw, (din, dout), jnp.float32),
            "b": scale * jax.random.normal(kb, (1, dout), jnp.float32)}


def init_layernorm_params(d):
    return {"g": jnp.ones((1, d), jnp.float32), "b": jnp.zeros((1, d), jnp.float32)}


def init_attention_layer(key, d_model, heads):
    ks = jax.random.split(key, 4)
    return {"q": init_linear_params(ks[0], d_model, d_model),
            "k": init_linear_params(ks[1], d_model, d_model),
            "v": init_linear_params(ks[2], d_model, d_model),
            "o": init_linear_params(ks[3], d_model, d_model),
            "heads": heads}


def init_tsa(key, seg_num, factor, d_model, heads, d_ff):
    d_ff = d_ff or 4 * d_model
    ks = jax.random.split(key, 8)
    sender = init_attention_layer(ks[1], d_model, heads)
    router = jax.random.normal(ks[3], (seg_num, factor, d_model), jnp.float32)
    # Router and its Q projection are both parameters -> fold the projection at init
    # time, so it is never recomputed per grid step nor replicated in HBM.
    router_q = (router.reshape(-1, d_model) @ sender["q"]["w"]
                + sender["q"]["b"]).reshape(seg_num, factor, d_model)
    return {
        "time_attn": init_attention_layer(ks[0], d_model, heads),
        "dim_sender": sender,
        "dim_receiver": init_attention_layer(ks[2], d_model, heads),
        "router": router,
        "router_q": router_q,
        "norm1": init_layernorm_params(d_model),
        "norm2": init_layernorm_params(d_model),
        "norm3": init_layernorm_params(d_model),
        "norm4": init_layernorm_params(d_model),
        "mlp1_fc1": init_linear_params(ks[4], d_model, d_ff),
        "mlp1_fc2": init_linear_params(ks[5], d_ff, d_model),
        "mlp2_fc1": init_linear_params(ks[6], d_model, d_ff),
        "mlp2_fc2": init_linear_params(ks[7], d_ff, d_model),
    }


def init_segment_merging(key, d_model, window_size):
    return {"linear": init_linear_params(key, window_size * d_model, d_model),
            "norm": init_layernorm_params(window_size * d_model),
            "window_size": window_size}


def init_block(key, d_model, window_size, depth, seg_num, factor, heads, d_ff):
    keys = jax.random.split(key, depth + 1)
    merge = init_segment_merging(keys[0], d_model, window_size) if window_size > 1 else None
    layers = [init_tsa(keys[i + 1], seg_num, factor, d_model, heads, d_ff)
              for i in range(depth)]
    return {"merge": merge, "layers": layers}


def init_encoder(key, blocks_num, d_model, window_size, depth, seg_num, factor, heads, d_ff):
    keys = jax.random.split(key, blocks_num)
    blocks = [init_block(keys[0], d_model, 1, depth, seg_num, factor, heads, d_ff)]
    for i in range(1, blocks_num):
        blocks.append(init_block(keys[i], d_model, window_size, depth,
                                 ceil(seg_num / window_size ** i), factor, heads, d_ff))
    return blocks


# ----------------------------------------------------------------------------
# Forward passes (plain-JAX glue around the fused Pallas kernels)
# ----------------------------------------------------------------------------
def tsa_forward(p, x):
    # TODO(synk): dropout layers are identity here (eval / inference mode).
    b, ts_d, seg_num, d_model = x.shape

    # --- stage 1: attention across time segments, batched over (b * ts_d) sub-batches ---
    time_in = x.reshape(b * ts_d, seg_num, d_model)
    time_enc = time_attention(p["time_attn"], time_in)
    dim_in = fused_resid_mlp(time_in.reshape(-1, d_model),
                             time_enc.reshape(-1, d_model),
                             p["norm1"], p["mlp1_fc1"], p["mlp1_fc2"], p["norm2"])

    # --- stage 2: router-mediated attention across series dimensions ---
    # TODO(synk): this rearrange (and the inverse at the end) is still a plain-XLA HBM
    # transpose; folding it into a BlockSpec would require an in-kernel major-dim
    # transpose which Mosaic does not reliably support.
    dim_send = dim_in.reshape(b, ts_d, seg_num, d_model).transpose(0, 2, 1, 3) \
                     .reshape(b * seg_num, ts_d, d_model)
    dim_receive = dim_attention(p["dim_sender"], p["dim_receiver"], p["router_q"],
                                dim_send, seg_num)
    dim_enc = fused_resid_mlp(dim_send.reshape(-1, d_model),
                              dim_receive.reshape(-1, d_model),
                              p["norm3"], p["mlp2_fc1"], p["mlp2_fc2"], p["norm4"])
    return dim_enc.reshape(b, seg_num, ts_d, d_model).transpose(0, 2, 1, 3)


def segment_merging_forward(p, x):
    b, d, seg_num, model_dim = x.shape
    w = p["window_size"]
    pad_num = seg_num % w
    if pad_num != 0:
        pad_num = w - pad_num
        x = jnp.concatenate([x, x[:, :, -pad_num:, :]], axis=2)
        seg_num = seg_num + pad_num
    # interleaved concat of window segments == reshape to (.., seg//w, w*model_dim)
    x2d = x.reshape(b, d, seg_num // w, w * model_dim).reshape(-1, w * model_dim)
    out = fused_merge(x2d, p["norm"], p["linear"])
    return out.reshape(b, d, seg_num // w, model_dim)


def block_forward(p, x):
    if p["merge"] is not None:
        x = segment_merging_forward(p["merge"], x)
    for layer in p["layers"]:
        x = tsa_forward(layer, x)
    return x


def encoder_forward(params, x):
    encode_x = [x]
    for block in params:
        x = block_forward(block, x)
        encode_x.append(x)
    return encode_x


# ----------------------------------------------------------------------------
if __name__ == "__main__":
    batch, data_dim, seg_num, d_model = 2, 4, 8, 32
    heads, factor, window_size, depth, blocks_num, d_ff = 2, 2, 2, 1, 2, 64

    key = jax.random.PRNGKey(0)
    kx, kp = jax.random.split(key)
    x = jax.random.normal(kx, (batch, data_dim, seg_num, d_model), jnp.float32)
    params = init_encoder(kp, blocks_num, d_model, window_size, depth,
                          seg_num, factor, heads, d_ff)

    outs = encoder_forward(params, x)
    outs = jax.block_until_ready(outs)

    assert len(outs) == blocks_num + 1
    assert outs[0].shape == (batch, data_dim, seg_num, d_model)
    assert outs[1].shape == (batch, data_dim, seg_num, d_model)
    assert outs[2].shape == (batch, data_dim, seg_num // window_size, d_model)
    assert all(bool(jnp.all(jnp.isfinite(o))) for o in outs)
    print("KERNEL_OK")
</pallas_src>

<mosaic_0001>
module attributes {stable_mosaic.version = 11 : i64} {
  func.func @_time_attn_kernel(%arg0: i32, %arg1: memref<4x8x32xf32, #tpu.memory_space<vmem>>, %arg2: memref<32x32xf32, #tpu.memory_space<vmem>>, %arg3: memref<1x32xf32, #tpu.memory_space<vmem>>, %arg4: memref<32x32xf32, #tpu.memory_space<vmem>>, %arg5: memref<1x32xf32, #tpu.memory_space<vmem>>, %arg6: memref<32x32xf32, #tpu.memory_space<vmem>>, %arg7: memref<1x32xf32, #tpu.memory_space<vmem>>, %arg8: memref<32x32xf32, #tpu.memory_space<vmem>>, %arg9: memref<1x32xf32, #tpu.memory_space<vmem>>, %arg10: memref<4x8x32xf32, #tpu.memory_space<vmem>>) attributes {dimension_semantics = [#tpu.dimension_semantics<parallel>], iteration_bounds = array<i64: 2>, scalar_prefetch = 0 : i64, scratch_operands = 0 : i64, tpu.core_type = #tpu.core_type<tc>, window_params = [{transform_indices = @transform_0, window_bounds = array<i64: 4, 8, 32>}, {pipeline_mode = #tpu.pipeline_mode<synchronous>, transform_indices = @transform_1, window_bounds = array<i64: 32, 32>}, {pipeline_mode = #tpu.pipeline_mode<synchronous>, transform_indices = @transform_2, window_bounds = array<i64: 1, 32>}, {pipeline_mode = #tpu.pipeline_mode<synchronous>, transform_indices = @transform_3, window_bounds = array<i64: 32, 32>}, {pipeline_mode = #tpu.pipeline_mode<synchronous>, transform_indices = @transform_4, window_bounds = array<i64: 1, 32>}, {pipeline_mode = #tpu.pipeline_mode<synchronous>, transform_indices = @transform_5, window_bounds = array<i64: 32, 32>}, {pipeline_mode = #tpu.pipeline_mode<synchronous>, transform_indices = @transform_6, window_bounds = array<i64: 1, 32>}, {pipeline_mode = #tpu.pipeline_mode<synchronous>, transform_indices = @transform_7, window_bounds = array<i64: 32, 32>}, {pipeline_mode = #tpu.pipeline_mode<synchronous>, transform_indices = @transform_8, window_bounds = array<i64: 1, 32>}, {transform_indices = @transform_9, window_bounds = array<i64: 4, 8, 32>}]} {
    %c0 = arith.constant 0 : index
    %c0_0 = arith.constant 0 : index
    %c0_1 = arith.constant 0 : index
    %0 = vector.load %arg1[%c0, %c0_0, %c0_1] : memref<4x8x32xf32, #tpu.memory_space<vmem>>, vector<4x8x32xf32>
    %c0_2 = arith.constant 0 : index
    %c0_3 = arith.constant 0 : index
    %1 = vector.load %arg2[%c0_2, %c0_3] : memref<32x32xf32, #tpu.memory_space<vmem>>, vector<32x32xf32>
    %c0_4 = arith.constant 0 : index
    %c0_5 = arith.constant 0 : index
    %2 = vector.load %arg3[%c0_4, %c0_5] : memref<1x32xf32, #tpu.memory_space<vmem>>, vector<1x32xf32>
    %c0_6 = arith.constant 0 : index
    %c0_7 = arith.constant 0 : index
    %3 = vector.load %arg4[%c0_6, %c0_7] : memref<32x32xf32, #tpu.memory_space<vmem>>, vector<32x32xf32>
    %c0_8 = arith.constant 0 : index
    %c0_9 = arith.constant 0 : index
    %4 = vector.load %arg5[%c0_8, %c0_9] : memref<1x32xf32, #tpu.memory_space<vmem>>, vector<1x32xf32>
    %c0_10 = arith.constant 0 : index
    %c0_11 = arith.constant 0 : index
    %5 = vector.load %arg6[%c0_10, %c0_11] : memref<32x32xf32, #tpu.memory_space<vmem>>, vector<32x32xf32>
    %c0_12 = arith.constant 0 : index
    %c0_13 = arith.constant 0 : index
    %6 = vector.load %arg7[%c0_12, %c0_13] : memref<1x32xf32, #tpu.memory_space<vmem>>, vector<1x32xf32>
    %c0_14 = arith.constant 0 : index
    %c0_15 = arith.constant 0 : index
    %7 = vector.load %arg8[%c0_14, %c0_15] : memref<32x32xf32, #tpu.memory_space<vmem>>, vector<32x32xf32>
    %c0_16 = arith.constant 0 : index
    %c0_17 = arith.constant 0 : index
    %8 = vector.load %arg9[%c0_16, %c0_17] : memref<1x32xf32, #tpu.memory_space<vmem>>, vector<1x32xf32>
    %9 = vector.shape_cast %0 : vector<4x8x32xf32> to vector<32x32xf32>
    %10 = arith.truncf %9 : vector<32x32xf32> to vector<32x32xbf16>
    %11 = arith.truncf %1 : vector<32x32xf32> to vector<32x32xbf16>
    %cst = arith.constant dense<0.000000e+00> : vector<32x32xf32>
    %12 = tpu.matmul %10, %11, %cst {dimension_numbers = #tpu.dot_dimension_numbers<[1], [0], [0], [1], [0, 0, 1, 1], [], []>} : vector<32x32xbf16>, vector<32x32xbf16>, vector<32x32xf32> -> vector<32x32xf32>
    %13 = vector.broadcast %2 : vector<1x32xf32> to vector<32x32xf32>
    %14 = arith.addf %12, %13 : vector<32x32xf32>
    %15 = vector.shape_cast %14 : vector<32x32xf32> to vector<4x8x32xf32>
    %16 = vector.shape_cast %0 : vector<4x8x32xf32> to vector<32x32xf32>
    %17 = arith.truncf %16 : vector<32x32xf32> to vector<32x32xbf16>
    %18 = arith.truncf %3 : vector<32x32xf32> to vector<32x32xbf16>
    %cst_18 = arith.constant dense<0.000000e+00> : vector<32x32xf32>
    %19 = tpu.matmul %17, %18, %cst_18 {dimension_numbers = #tpu.dot_dimension_numbers<[1], [0], [0], [1], [0, 0, 1, 1], [], []>} : vector<32x32xbf16>, vector<32x32xbf16>, vector<32x32xf32> -> vector<32x32xf32>
    %20 = vector.broadcast %4 : vector<1x32xf32> to vector<32x32xf32>
    %21 = arith.addf %19, %20 : vector<32x32xf32>
    %22 = vector.shape_cast %21 : vector<32x32xf32> to vector<4x8x32xf32>
    %23 = vector.shape_cast %0 : vector<4x8x32xf32> to vector<32x32xf32>
    %24 = arith.truncf %23 : vector<32x32xf32> to vector<32x32xbf16>
    %25 = arith.truncf %5 : vector<32x32xf32> to vector<32x32xbf16>
    %cst_19 = arith.constant dense<0.000000e+00> : vector<32x32xf32>
    %26 = tpu.matmul %24, %25, %cst_19 {dimension_numbers = #tpu.dot_dimension_numbers<[1], [0], [0], [1], [0, 0, 1, 1], [], []>} : vector<32x32xbf16>, vector<32x32xbf16>, vector<32x32xf32> -> vector<32x32xf32>
    %27 = vector.broadcast %6 : vector<1x32xf32> to vector<32x32xf32>
    %28 = arith.addf %26, %27 : vector<32x32xf32>
    %29 = vector.shape_cast %28 : vector<32x32xf32> to vector<4x8x32xf32>
    %30 = vector.extract_strided_slice %15 {offsets = [0, 0, 0], sizes = [4, 8, 16], strides = [1, 1, 1]} : vector<4x8x32xf32> to vector<4x8x16xf32>
    %31 = arith.truncf %30 : vector<4x8x16xf32> to vector<4x8x16xbf16>
    %32 = vector.extract_strided_slice %22 {offsets = [0, 0, 0], sizes = [4, 8, 16], strides = [1, 1, 1]} : vector<4x8x32xf32> to vector<4x8x16xf32>
    %33 = arith.truncf %32 : vector<4x8x16xf32> to vector<4x8x16xbf16>
    %34 = vector.extract_strided_slice %29 {offsets = [0, 0, 0], sizes = [4, 8, 16], strides = [1, 1, 1]} : vector<4x8x32xf32> to vector<4x8x16xf32>
    %35 = arith.truncf %34 : vector<4x8x16xf32> to vector<4x8x16xbf16>
    %cst_20 = arith.constant dense<0.000000e+00> : vector<4x8x8xf32>
    %36 = tpu.matmul %31, %33, %cst_20 {dimension_numbers = #tpu.dot_dimension_numbers<[2], [2], [1], [1], [0, 0, 0, 1, 1, 1], [0], [0]>} : vector<4x8x16xbf16>, vector<4x8x16xbf16>, vector<4x8x8xf32> -> vector<4x8x8xf32>
    %cst_21 = arith.constant 2.500000e-01 : f32
    %37 = vector.broadcast %cst_21 : f32 to vector<4x8x8xf32>
    %38 = arith.mulf %36, %37 : vector<4x8x8xf32>
    %cst_22 = arith.constant dense<0xFF800000> : vector<4x8xf32>
    %39 = vector.multi_reduction <maximumf>, %38, %cst_22 [2] : vector<4x8x8xf32> to vector<4x8xf32>
    %40 = vector.shape_cast %39 : vector<4x8xf32> to vector<4x8x1xf32>
    %41 = vector.broadcast %40 : vector<4x8x1xf32> to vector<4x8x8xf32>
    %42 = arith.subf %38, %41 : vector<4x8x8xf32>
    %43 = math.exp %42 : vector<4x8x8xf32>
    %cst_23 = arith.constant dense<0.000000e+00> : vector<4x8xf32>
    %44 = vector.multi_reduction <add>, %43, %cst_23 [2] : vector<4x8x8xf32> to vector<4x8xf32>
    %45 = vector.shape_cast %44 : vector<4x8xf32> to vector<4x8x1xf32>
    %46 = tpu.reciprocal %45 {approx = true} : vector<4x8x1xf32> -> vector<4x8x1xf32>
    %47 = vector.broadcast %46 : vector<4x8x1xf32> to vector<4x8x8xf32>
    %48 = arith.mulf %43, %47 : vector<4x8x8xf32>
    %49 = arith.truncf %48 : vector<4x8x8xf32> to vector<4x8x8xbf16>
    %cst_24 = arith.constant dense<0.000000e+00> : vector<4x8x16xf32>
    %50 = tpu.matmul %49, %35, %cst_24 {dimension_numbers = #tpu.dot_dimension_numbers<[2], [1], [1], [2], [0, 0, 0, 1, 1, 2], [0], [0]>} : vector<4x8x8xbf16>, vector<4x8x16xbf16>, vector<4x8x16xf32> -> vector<4x8x16xf32>
    %51 = vector.extract_strided_slice %15 {offsets = [0, 0, 16], sizes = [4, 8, 16], strides = [1, 1, 1]} : vector<4x8x32xf32> to vector<4x8x16xf32>
    %52 = arith.truncf %51 : vector<4x8x16xf32> to vector<4x8x16xbf16>
    %53 = vector.extract_strided_slice %22 {offsets = [0, 0, 16], sizes = [4, 8, 16], strides = [1, 1, 1]} : vector<4x8x32xf32> to vector<4x8x16xf32>
    %54 = arith.truncf %53 : vector<4x8x16xf32> to vector<4x8x16xbf16>
    %55 = vector.extract_strided_slice %29 {offsets = [0, 0, 16], sizes = [4, 8, 16], strides = [1, 1, 1]} : vector<4x8x32xf32> to vector<4x8x16xf32>
    %56 = arith.truncf %55 : vector<4x8x16xf32> to vector<4x8x16xbf16>
    %cst_25 = arith.constant dense<0.000000e+00> : vector<4x8x8xf32>
    %57 = tpu.matmul %52, %54, %cst_25 {dimension_numbers = #tpu.dot_dimension_numbers<[2], [2], [1], [1], [0, 0, 0, 1, 1, 1], [0], [0]>} : vector<4x8x16xbf16>, vector<4x8x16xbf16>, vector<4x8x8xf32> -> vector<4x8x8xf32>
    %cst_26 = arith.constant 2.500000e-01 : f32
    %58 = vector.broadcast %cst_26 : f32 to vector<4x8x8xf32>
    %59 = arith.mulf %57, %58 : vector<4x8x8xf32>
    %cst_27 = arith.constant dense<0xFF800000> : vector<4x8xf32>
    %60 = vector.multi_reduction <maximumf>, %59, %cst_27 [2] : vector<4x8x8xf32> to vector<4x8xf32>
    %61 = vector.shape_cast %60 : vector<4x8xf32> to vector<4x8x1xf32>
    %62 = vector.broadcast %61 : vector<4x8x1xf32> to vector<4x8x8xf32>
    %63 = arith.subf %59, %62 : vector<4x8x8xf32>
    %64 = math.exp %63 : vector<4x8x8xf32>
    %cst_28 = arith.constant dense<0.000000e+00> : vector<4x8xf32>
    %65 = vector.multi_reduction <add>, %64, %cst_28 [2] : vector<4x8x8xf32> to vector<4x8xf32>
    %66 = vector.shape_cast %65 : vector<4x8xf32> to vector<4x8x1xf32>
    %67 = tpu.reciprocal %66 {approx = true} : vector<4x8x1xf32> -> vector<4x8x1xf32>
    %68 = vector.broadcast %67 : vector<4x8x1xf32> to vector<4x8x8xf32>
    %69 = arith.mulf %64, %68 : vector<4x8x8xf32>
    %70 = arith.truncf %69 : vector<4x8x8xf32> to vector<4x8x8xbf16>
    %cst_29 = arith.constant dense<0.000000e+00> : vector<4x8x16xf32>
    %71 = tpu.matmul %70, %56, %cst_29 {dimension_numbers = #tpu.dot_dimension_numbers<[2], [1], [1], [2], [0, 0, 0, 1, 1, 2], [0], [0]>} : vector<4x8x8xbf16>, vector<4x8x16xbf16>, vector<4x8x16xf32> -> vector<4x8x16xf32>
    %72 = tpu.concatenate %50, %71 in 2 : vector<4x8x16xf32>, vector<4x8x16xf32> -> vector<4x8x32xf32>
    %73 = vector.shape_cast %72 : vector<4x8x32xf32> to vector<32x32xf32>
    %74 = arith.truncf %73 : vector<32x32xf32> to vector<32x32xbf16>
    %75 = arith.truncf %7 : vector<32x32xf32> to vector<32x32xbf16>
    %cst_30 = arith.constant dense<0.000000e+00> : vector<32x32xf32>
    %76 = tpu.matmul %74, %75, %cst_30 {dimension_numbers = #tpu.dot_dimension_numbers<[1], [0], [0], [1], [0, 0, 1, 1], [], []>} : vector<32x32xbf16>, vector<32x32xbf16>, vector<32x32xf32> -> vector<32x32xf32>
    %77 = vector.broadcast %8 : vector<1x32xf32> to vector<32x32xf32>
    %78 = arith.addf %76, %77 : vector<32x32xf32>
    %79 = vector.shape_cast %78 : vector<32x32xf32> to vector<4x8x32xf32>
    %c0_31 = arith.constant 0 : index
    %c0_32 = arith.constant 0 : index
    %c0_33 = arith.constant 0 : index
    %80 = vector.load %arg10[%c0_31, %c0_32, %c0_33] : memref<4x8x32xf32, #tpu.memory_space<vmem>>, vector<4x8x32xf32>
    tpu.vector_store %arg10[%c0_31, %c0_32, %c0_33], %79 {strides = array<i32>} : memref<4x8x32xf32, #tpu.memory_space<vmem>>, vector<4x8x32xf32>,
    return
  }
  func.func @transform_0(%arg0: i32) -> (i32, i32, i32) {
    %c0_i32 = arith.constant 0 : i32
    %c0_i32_0 = arith.constant 0 : i32
    %c0_i32_1 = arith.constant 0 : i32
    return %arg0, %c0_i32, %c0_i32_0 : i32, i32, i32
  }
  func.func @transform_1(%arg0: i32) -> (i32, i32) {
    %c0_i32 = arith.constant 0 : i32
    %c0_i32_0 = arith.constant 0 : i32
    %c0_i32_1 = arith.constant 0 : i32
    return %c0_i32, %c0_i32_0 : i32, i32
  }
  func.func @transform_2(%arg0: i32) -> (i32, i32) {
    %c0_i32 = arith.constant 0 : i32
    %c0_i32_0 = arith.constant 0 : i32
    %c0_i32_1 = arith.constant 0 : i32
    return %c0_i32, %c0_i32_0 : i32, i32
  }
  func.func @transform_3(%arg0: i32) -> (i32, i32) {
    %c0_i32 = arith.constant 0 : i32
    %c0_i32_0 = arith.constant 0 : i32
    %c0_i32_1 = arith.constant 0 : i32
    return %c0_i32, %c0_i32_0 : i32, i32
  }
  func.func @transform_4(%arg0: i32) -> (i32, i32) {
    %c0_i32 = arith.constant 0 : i32
    %c0_i32_0 = arith.constant 0 : i32
    %c0_i32_1 = arith.constant 0 : i32
    return %c0_i32, %c0_i32_0 : i32, i32
  }
  func.func @transform_5(%arg0: i32) -> (i32, i32) {
    %c0_i32 = arith.constant 0 : i32
    %c0_i32_0 = arith.constant 0 : i32
    %c0_i32_1 = arith.constant 0 : i32
    return %c0_i32, %c0_i32_0 : i32, i32
  }
  func.func @transform_6(%arg0: i32) -> (i32, i32) {
    %c0_i32 = arith.constant 0 : i32
    %c0_i32_0 = arith.constant 0 : i32
    %c0_i32_1 = arith.constant 0 : i32
    return %c0_i32, %c0_i32_0 : i32, i32
  }
  func.func @transform_7(%arg0: i32) -> (i32, i32) {
    %c0_i32 = arith.constant 0 : i32
    %c0_i32_0 = arith.constant 0 : i32
    %c0_i32_1 = arith.constant 0 : i32
    return %c0_i32, %c0_i32_0 : i32, i32
  }
  func.func @transform_8(%arg0: i32) -> (i32, i32) {
    %c0_i32 = arith.constant 0 : i32
    %c0_i32_0 = arith.constant 0 : i32
    %c0_i32_1 = arith.constant 0 : i32
    return %c0_i32, %c0_i32_0 : i32, i32
  }
  func.func @transform_9(%arg0: i32) -> (i32, i32, i32) {
    %c0_i32 = arith.constant 0 : i32
    %c0_i32_0 = arith.constant 0 : i32
    %c0_i32_1 = arith.constant 0 : i32
    return %arg0, %c0_i32, %c0_i32_0 : i32, i32, i32
  }
}

</mosaic_0001>

<llo_original>
// kernel: tpu_custom_call.1
$region0: #{tpu_custom_call.1}
  #allocation0 [shape = 'u32[]', space=smem, size = 0x4, offset = 0x4, fixed_abs, tag = 'smem constant byte address 0x4 - core index']
  #allocation1 [shape = 'u32[72,128]{1,0:T(1,128)}', space=vmem, size = 0x9000, scoped, tag = 'internal scratch']
  %s0 = inlined_call_operand.hbm [shape: f32[8,8,32], index: 0, kind: input, shape index: {}]
  %s1 = inlined_call_operand.hbm [shape: f32[32,32], index: 1, kind: input, shape index: {}]
  %s2 = inlined_call_operand.vmem [shape: f32[1,32], index: 2, kind: input, shape index: {}]
  %s3 = inlined_call_operand.hbm [shape: f32[32,32], index: 3, kind: input, shape index: {}]
  %s4 = inlined_call_operand.vmem [shape: f32[1,32], index: 4, kind: input, shape index: {}]
  %s5 = inlined_call_operand.hbm [shape: f32[32,32], index: 5, kind: input, shape index: {}]
  %s6 = inlined_call_operand.vmem [shape: f32[1,32], index: 6, kind: input, shape index: {}]
  %s7 = inlined_call_operand.hbm [shape: f32[32,32], index: 7, kind: input, shape index: {}]
  %s8 = inlined_call_operand.vmem [shape: f32[1,32], index: 8, kind: input, shape index: {}]
  %s9 = inlined_call_operand.hbm [shape: f32[8,8,32], index: 9, kind: output, shape index: {}]
  %s10 = sld [smem:[#allocation0]]
  $region89: #{tpu_custom_call.1} parent=0
    _
  %s12 = ssub.s32 1, %s10
  %s13 = scalar_select 0, %s12, %s10
  $region1: #{tpu_custom_call.1} parent=0
    #allocation2 [shape = 'u8[32768]{0}', space=vmem, size = 0x8000, scoped, tag = 'input window, operand 0']
    #allocation3 [shape = 's32[2]{0}', space=sflag, size = 0x8, scoped, tag = 'scoped memory for tpu_custom_call.1']
    #allocation4 [shape = 's32[2]{0}', space=sflag, size = 0x8, scoped, tag = 'scoped memory for tpu_custom_call.1']
    #allocation5 [shape = 'u8[16384]{0}', space=vmem, size = 0x4000, scoped, tag = 'input window, operand 1, single buffered']
    #allocation6 [shape = 's32[1]{0}', space=sflag, size = 0x4, scoped, tag = 'scoped memory for tpu_custom_call.1']
    #allocation7 [shape = 'u8[16384]{0}', space=vmem, size = 0x4000, scoped, tag = 'input window, operand 3, single buffered']
    #allocation8 [shape = 'u8[16384]{0}', space=vmem, size = 0x4000, scoped, tag = 'input window, operand 5, single buffered']
    #allocation9 [shape = 's32[1]{0}', space=sflag, size = 0x4, scoped, tag = 'scoped memory for tpu_custom_call.1']
    #allocation10 [shape = 'u8[16384]{0}', space=vmem, size = 0x4000, scoped, tag = 'input window, operand 7, single buffered']
    #allocation11 [shape = 'u8[32768]{0}', space=vmem, size = 0x8000, scoped, tag = 'output window, operand 0']
    %14 = vsyncpa [#allocation3], 0
    %s15 = scalar_lea.sflag [#allocation3], 1
    %16 = vsyncpa %s15, 0
    %17 = vsyncpa [#allocation6], 0
    %18 = vsyncpa [#allocation9], 0
    %19 = vsyncpa [#allocation4], 0
    %s20 = scalar_lea.sflag [#allocation4], 1
    %21 = vsyncpa %s20, 0
    loop: start=0, step=1, limit=4
    $region2: #{tpu_custom_call.1} parent=1 // loop_pre_header
      _
    $region3: #{tpu_custom_call.1} parent=1 // loop_header
      %s23 = sphi 0, %s27
      %p24 = scmp.ge.s32.totalorder %s23, 4
      %s33 = sphi 0, %s35
      %s36 = sphi 0, %s33
      %s37 = sphi 0, %s36
      %s53 = sphi 0, %s37
      %s57 = sphi 0, %s57
      %s59 = sphi 0, %s57
      %s60 = sphi 0, %s59
      %s74 = sphi 0, %s60
      %s78 = sphi 0, %s78
      %s80 = sphi 0, %s78
      %s81 = sphi 0, %s80
      %s95 = sphi 0, %s81
      %s99 = sphi 0, %s99
      %s101 = sphi 0, %s99
      %s102 = sphi 0, %s101
      %s116 = sphi 0, %s102
      %s120 = sphi 0, %s120
      %s122 = sphi 0, %s120
      %s123 = sphi 0, %s122
      %s137 = sphi 0, %s123
      %s141 = sphi 0, %s141
      %s143 = sphi 0, %s141
      %s144 = sphi 0, %s143
      %s158 = sphi 0, %s144
      %s162 = sphi 0, %s162
      %s164 = sphi 0, %s162
      %s165 = sphi 0, %s164
      %s179 = sphi 0, %s165
      %s183 = sphi 0, %s183
      %s185 = sphi 0, %s183
      %s186 = sphi 0, %s185
      %s200 = sphi 0, %s186
      %s204 = sphi 0, %s204
      %s206 = sphi 0, %s204
      %s207 = sphi 0, %s206
      %s221 = sphi 0, %s207
      %s227 = sphi 0, %s229
      %s230 = sphi 0, %s227
      %s231 = sphi 0, %s230
      %s247 = sphi 0, %s231
    $region4: #{tpu_custom_call.1} parent=1 // loop_header_branch
      %26 = sbr.rel (%p24) target = $region8
    $region5: #{tpu_custom_call.1} parent=1 // loop_body
      %s28 = ssub.s32 %s23, 1
      %s29 = ssub.s32 %s23, 2
      %s30 = sadd.s32 %s23, 1
      %s31 = ssub.s32 %s23, %s30
      %p32 = scmp.eq.s32.totalorder %s31, 0
      %s34 = sadd.s32 %s33, 1
      %s35 = scalar_select %p32, %s33, %s34
      %p38 = pneg %p32
      %p39 = scmp.eq.s32.totalorder %s23, 1
      %p40 = por %p38, %p39
      %p41 = scmp.ne.s32.totalorder %s33, %s36
      %p42 = scmp.eq.s32.totalorder %s23, 0
      %p43 = por %p41, %p42
      %p44 = scmp.ne.s32.totalorder %s33, %s36
      %p45 = scmp.eq.s32.totalorder %s28, 1
      %p46 = por %p44, %p45
      %p47 = scmp.ne.s32.totalorder %s36, %s37
      %p48 = scmp.eq.s32.totalorder %s28, 0
      %p49 = por %p47, %p48
      %p50 = scmp.ne.s32.totalorder %s36, %s37
      %p51 = scmp.eq.s32.totalorder %s29, 1
      %p52 = por %p50, %p51
      %p54 = scmp.ne.s32.totalorder %s37, %s53
      %p55 = scmp.eq.s32.totalorder %s29, 0
      %p56 = por %p54, %p55
      %s58 = sadd.s32 %s57, 1
      %p61 = scmp.eq.s32.totalorder %s23, 1
      %p62 = scmp.ne.s32.totalorder %s57, %s59
      %p63 = scmp.eq.s32.totalorder %s23, 0
      %p64 = por %p62, %p63
      %p65 = scmp.ne.s32.totalorder %s57, %s59
      %p66 = scmp.eq.s32.totalorder %s28, 1
      %p67 = por %p65, %p66
      %p68 = scmp.ne.s32.totalorder %s59, %s60
      %p69 = scmp.eq.s32.totalorder %s28, 0
      %p70 = por %p68, %p69
      %p71 = scmp.ne.s32.totalorder %s59, %s60
      %p72 = scmp.eq.s32.totalorder %s29, 1
      %p73 = por %p71, %p72
      %p75 = scmp.ne.s32.totalorder %s60, %s74
      %p76 = scmp.eq.s32.totalorder %s29, 0
      %p77 = por %p75, %p76
      %s79 = sadd.s32 %s78, 1
      %p82 = scmp.eq.s32.totalorder %s23, 1
      %p83 = scmp.ne.s32.totalorder %s78, %s80
      %p84 = scmp.eq.s32.totalorder %s23, 0
      %p85 = por %p83, %p84
      %p86 = scmp.ne.s32.totalorder %s78, %s80
      %p87 = scmp.eq.s32.totalorder %s28, 1
      %p88 = por %p86, %p87
      %p89 = scmp.ne.s32.totalorder %s80, %s81
      %p90 = scmp.eq.s32.totalorder %s28, 0
      %p91 = por %p89, %p90
      %p92 = scmp.ne.s32.totalorder %s80, %s81
      %p93 = scmp.eq.s32.totalorder %s29, 1
      %p94 = por %p92, %p93
      %p96 = scmp.ne.s32.totalorder %s81, %s95
      %p97 = scmp.eq.s32.totalorder %s29, 0
      %p98 = por %p96, %p97
      %s100 = sadd.s32 %s99, 1
      %p103 = scmp.eq.s32.totalorder %s23, 1
      %p104 = scmp.ne.s32.totalorder %s99, %s101
      %p105 = scmp.eq.s32.totalorder %s23, 0
      %p106 = por %p104, %p105
      %p107 = scmp.ne.s32.totalorder %s99, %s101
      %p108 = scmp.eq.s32.totalorder %s28, 1
      %p109 = por %p107, %p108
      %p110 = scmp.ne.s32.totalorder %s101, %s102
      %p111 = scmp.eq.s32.totalorder %s28, 0
      %p112 = por %p110, %p111
      %p113 = scmp.ne.s32.totalorder %s101, %s102
      %p114 = scmp.eq.s32.totalorder %s29, 1
      %p115 = por %p113, %p114
      %p117 = scmp.ne.s32.totalorder %s102, %s116
      %p118 = scmp.eq.s32.totalorder %s29, 0
      %p119 = por %p117, %p118
      %s121 = sadd.s32 %s120, 1
      %p124 = scmp.eq.s32.totalorder %s23, 1
      %p125 = scmp.ne.s32.totalorder %s120, %s122
      %p126 = scmp.eq.s32.totalorder %s23, 0
      %p127 = por %p125, %p126
      %p128 = scmp.ne.s32.totalorder %s120, %s122
      %p129 = scmp.eq.s32.totalorder %s28, 1
      %p130 = por %p128, %p129
      %p131 = scmp.ne.s32.totalorder %s122, %s123
      %p132 = scmp.eq.s32.totalorder %s28, 0
      %p133 = por %p131, %p132
      %p134 = scmp.ne.s32.totalorder %s122, %s123
      %p135 = scmp.eq.s32.totalorder %s29, 1
      %p136 = por %p134, %p135
      %p138 = scmp.ne.s32.totalorder %s123, %s137
      %p139 = scmp.eq.s32.totalorder %s29, 0
      %p140 = por %p138, %p139
      %s142 = sadd.s32 %s141, 1
      %p145 = scmp.eq.s32.totalorder %s23, 1
      %p146 = scmp.ne.s32.totalorder %s141, %s143
      %p147 = scmp.eq.s32.totalorder %s23, 0
      %p148 = por %p146, %p147
      %p149 = scmp.ne.s32.totalorder %s141, %s143
      %p150 = scmp.eq.s32.totalorder %s28, 1
      %p151 = por %p149, %p150
      %p152 = scmp.ne.s32.totalorder %s143, %s144
      %p153 = scmp.eq.s32.totalorder %s28, 0
      %p154 = por %p152, %p153
      %p155 = scmp.ne.s32.totalorder %s143, %s144
      %p156 = scmp.eq.s32.totalorder %s29, 1
      %p157 = por %p155, %p156
      %p159 = scmp.ne.s32.totalorder %s144, %s158
      %p160 = scmp.eq.s32.totalorder %s29, 0
      %p161 = por %p159, %p160
      %s163 = sadd.s32 %s162, 1
      %p166 = scmp.eq.s32.totalorder %s23, 1
      %p167 = scmp.ne.s32.totalorder %s162, %s164
      %p168 = scmp.eq.s32.totalorder %s23, 0
      %p169 = por %p167, %p168
      %p170 = scmp.ne.s32.totalorder %s162, %s164
      %p171 = scmp.eq.s32.totalorder %s28, 1
      %p172 = por %p170, %p171
      %p173 = scmp.ne.s32.totalorder %s164, %s165
      %p174 = scmp.eq.s32.totalorder %s28, 0
      %p175 = por %p173, %p174
      %p176 = scmp.ne.s32.totalorder %s164, %s165
      %p177 = scmp.eq.s32.totalorder %s29, 1
      %p178 = por %p176, %p177
      %p180 = scmp.ne.s32.totalorder %s165, %s179
      %p181 = scmp.eq.s32.totalorder %s29, 0
      %p182 = por %p180, %p181
      %s184 = sadd.s32 %s183, 1
      %p187 = scmp.eq.s32.totalorder %s23, 1
      %p188 = scmp.ne.s32.totalorder %s183, %s185
      %p189 = scmp.eq.s32.totalorder %s23, 0
      %p190 = por %p188, %p189
      %p191 = scmp.ne.s32.totalorder %s183, %s185
      %p192 = scmp.eq.s32.totalorder %s28, 1
      %p193 = por %p191, %p192
      %p194 = scmp.ne.s32.totalorder %s185, %s186
      %p195 = scmp.eq.s32.totalorder %s28, 0
      %p196 = por %p194, %p195
      %p197 = scmp.ne.s32.totalorder %s185, %s186
      %p198 = scmp.eq.s32.totalorder %s29, 1
      %p199 = por %p197, %p198
      %p201 = scmp.ne.s32.totalorder %s186, %s200
      %p202 = scmp.eq.s32.totalorder %s29, 0
      %p203 = por %p201, %p202
      %s205 = sadd.s32 %s204, 1
      %p208 = scmp.eq.s32.totalorder %s23, 1
      %p209 = scmp.ne.s32.totalorder %s204, %s206
      %p210 = scmp.eq.s32.totalorder %s23, 0
      %p211 = por %p209, %p210
      %p212 = scmp.ne.s32.totalorder %s204, %s206
      %p213 = scmp.eq.s32.totalorder %s28, 1
      %p214 = por %p212, %p213
      %p215 = scmp.ne.s32.totalorder %s206, %s207
      %p216 = scmp.eq.s32.totalorder %s28, 0
      %p217 = por %p215, %p216
      %p218 = scmp.ne.s32.totalorder %s206, %s207
      %p219 = scmp.eq.s32.totalorder %s29, 1
      %p220 = por %p218, %p219
      %p222 = scmp.ne.s32.totalorder %s207, %s221
      %p223 = scmp.eq.s32.totalorder %s29, 0
      %p224 = por %p222, %p223
      %s225 = ssub.s32 %s23, %s30
      %p226 = scmp.eq.s32.totalorder %s225, 0
      %s228 = sadd.s32 %s227, 1
      %s229 = scalar_select %p226, %s227, %s228
      %p232 = pneg %p226
      %p233 = scmp.eq.s32.totalorder %s23, 1
      %p234 = por %p232, %p233
      %p235 = scmp.ne.s32.totalorder %s227, %s230
      %p236 = scmp.eq.s32.totalorder %s23, 0
      %p237 = por %p235, %p236
      %p238 = scmp.ne.s32.totalorder %s227, %s230
      %p239 = scmp.eq.s32.totalorder %s28, 1
      %p240 = por %p238, %p239
      %p241 = scmp.ne.s32.totalorder %s230, %s231
      %p242 = scmp.eq.s32.totalorder %s28, 0
      %p243 = por %p241, %p242
      %p244 = scmp.ne.s32.totalorder %s230, %s231
      %p245 = scmp.eq.s32.totalorder %s29, 1
      %p246 = por %p244, %p245
      %p248 = scmp.ne.s32.totalorder %s231, %s247
      %p249 = scmp.eq.s32.totalorder %s29, 0
      %p250 = por %p248, %p249
      %p251 = scmp.le.s32.totalorder 1, %s23
      %p252 = scmp.lt.s32.totalorder %s23, 3
      %p253 = pnand %p251, %p252
      %p254 = pneg %p253
      // Predicated region
      $region9: #{tpu_custom_call.1} parent=5 // pred_check
        _
      $region10: #{tpu_custom_call.1} parent=5 // pred_check_branch
        %256 = sbr.rel (%p253) target = $region12
      $region11: #{tpu_custom_call.1} parent=5 // pred_region
        %s257 = ssub.s32 %s23, 1
        // Predicated region
        $region13: #{tpu_custom_call.1} parent=11 // pred_check
          %p258 = pneg %p70
        $region14: #{tpu_custom_call.1} parent=11 // pred_check_branch
          %260 = sbr.rel (%p258) target = $region16
        $region15: #{tpu_custom_call.1} parent=11 // pred_region
          %262 = vsyncadd [#allocation6], 0
          %s263 = sshll.u32 %s1, 4
          %s264 = int_to_ptr.hbm [resolvable:$true] %s263
          %s265 = sshll.u32 [#allocation5], 4
          %s266 = int_to_ptr.vmem [resolvable:$true] %s265
          %271 = dma.hbm_to_vmem [thread:$0]  %s264, 512, %s266, [#allocation6], 128, 128, 8
        $region16: #{tpu_custom_call.1} parent=11 // pred_fallthru
          _
        // Predicated region
        $region17: #{tpu_custom_call.1} parent=11 // pred_check
          %p272 = pneg %p91
        $region18: #{tpu_custom_call.1} parent=11 // pred_check_branch
          %274 = sbr.rel (%p272) target = $region20
        $region19: #{tpu_custom_call.1} parent=11 // pred_region
          _
        $region20: #{tpu_custom_call.1} parent=11 // pred_fallthru
          _
        // Predicated region
        $region21: #{tpu_custom_call.1} parent=11 // pred_check
          %p275 = pneg %p112
        $region22: #{tpu_custom_call.1} parent=11 // pred_check_branch
          %277 = sbr.rel (%p275) target = $region24
        $region23: #{tpu_custom_call.1} parent=11 // pred_region
          %279 = vsyncadd [#allocation6], 0
          %s280 = sshll.u32 %s3, 4
          %s281 = int_to_ptr.hbm [resolvable:$true] %s280
          %s282 = sshll.u32 [#allocation7], 4
          %s283 = int_to_ptr.vmem [resolvable:$true] %s282
          %288 = dma.hbm_to_vmem [thread:$0]  %s281, 512, %s283, [#allocation6], 128, 128, 8
        $region24: #{tpu_custom_call.1} parent=11 // pred_fallthru
          _
        // Predicated region
        $region25: #{tpu_custom_call.1} parent=11 // pred_check
          %p289 = pneg %p133
        $region26: #{tpu_custom_call.1} parent=11 // pred_check_branch
          %291 = sbr.rel (%p289) target = $region28
        $region27: #{tpu_custom_call.1} parent=11 // pred_region
          _
        $region28: #{tpu_custom_call.1} parent=11 // pred_fallthru
          _
        // Predicated region
        $region29: #{tpu_custom_call.1} parent=11 // pred_check
          %p292 = pneg %p154
        $region30: #{tpu_custom_call.1} parent=11 // pred_check_branch
          %294 = sbr.rel (%p292) target = $region32
        $region31: #{tpu_custom_call.1} parent=11 // pred_region
          %296 = vsyncadd [#allocation9], 0
          %s297 = sshll.u32 %s5, 4
          %s298 = int_to_ptr.hbm [resolvable:$true] %s297
          %s299 = sshll.u32 [#allocation8], 4
          %s300 = int_to_ptr.vmem [resolvable:$true] %s299
          %305 = dma.hbm_to_vmem [thread:$0]  %s298, 512, %s300, [#allocation9], 128, 128, 8
        $region32: #{tpu_custom_call.1} parent=11 // pred_fallthru
          _
        // Predicated region
        $region33: #{tpu_custom_call.1} parent=11 // pred_check
          %p306 = pneg %p175
        $region34: #{tpu_custom_call.1} parent=11 // pred_check_branch
          %308 = sbr.rel (%p306) target = $region36
        $region35: #{tpu_custom_call.1} parent=11 // pred_region
          _
        $region36: #{tpu_custom_call.1} parent=11 // pred_fallthru
          _
        // Predicated region
        $region37: #{tpu_custom_call.1} parent=11 // pred_check
          %p309 = pneg %p196
        $region38: #{tpu_custom_call.1} parent=11 // pred_check_branch
          %311 = sbr.rel (%p309) target = $region40
        $region39: #{tpu_custom_call.1} parent=11 // pred_region
          %313 = vsyncadd [#allocation9], 0
          %s314 = sshll.u32 %s7, 4
          %s315 = int_to_ptr.hbm [resolvable:$true] %s314
          %s316 = sshll.u32 [#allocation10], 4
          %s317 = int_to_ptr.vmem [resolvable:$true] %s316
          %322 = dma.hbm_to_vmem [thread:$0]  %s315, 512, %s317, [#allocation9], 128, 128, 8
        $region40: #{tpu_custom_call.1} parent=11 // pred_fallthru
          _
        // Predicated region
        $region41: #{tpu_custom_call.1} parent=11 // pred_check
          %p323 = pneg %p217
        $region42: #{tpu_custom_call.1} parent=11 // pred_check_branch
          %325 = sbr.rel (%p323) target = $region44
        $region43: #{tpu_custom_call.1} parent=11 // pred_region
          _
        $region44: #{tpu_custom_call.1} parent=11 // pred_fallthru
          _
      $region12: #{tpu_custom_call.1} parent=5 // pred_fallthru
        _
      %p326 = scmp.lt.s32.totalorder %s23, 2
      // Predicated region
      $region45: #{tpu_custom_call.1} parent=5 // pred_check
        %p327 = pneg %p326
      $region46: #{tpu_custom_call.1} parent=5 // pred_check_branch
        %329 = sbr.rel (%p327) target = $region48
      $region47: #{tpu_custom_call.1} parent=5 // pred_region
        // Predicated region
        $region49: #{tpu_custom_call.1} parent=47 // pred_check
          %p330 = pneg %p43
        $region50: #{tpu_custom_call.1} parent=47 // pred_check_branch
          %332 = sbr.rel (%p330) target = $region52
        $region51: #{tpu_custom_call.1} parent=47 // pred_region
          %s333 = sand.u32 %s33, 1
          %s334 = scalar_lea.sflag [#allocation3], %s333
          %s335 = sand.u32 %s33, 1
          %s336 = smul.addr %s335, 32
          %s337 = scalar_lea.vmem [#allocation2], %s336
          %s338 = smul.u32 4, %s23
          %340 = vsyncadd %s334, 0
          %s341 = smul.addr %s338, 8
          %s342 = scalar_lea.hbm %s0, %s341
          %s343 = sshll.u32 %s342, 4
          %s344 = int_to_ptr.hbm [resolvable:$true] %s343
          %s345 = sshll.u32 %s337, 4
          %s346 = int_to_ptr.vmem [resolvable:$true] %s345
          %351 = dma.hbm_to_vmem [thread:$0]  %s344, 512, %s346, %s334, 128, 128, 8
        $region52: #{tpu_custom_call.1} parent=47 // pred_fallthru
          _
      $region48: #{tpu_custom_call.1} parent=5 // pred_fallthru
        _
      %p352 = scmp.le.s32.totalorder 1, %s23
      %p353 = scmp.lt.s32.totalorder %s23, 3
      %p354 = pnand %p352, %p353
      %p355 = pneg %p354
      // Predicated region
      $region53: #{tpu_custom_call.1} parent=5 // pred_check
        _
      $region54: #{tpu_custom_call.1} parent=5 // pred_check_branch
        %357 = sbr.rel (%p354) target = $region56
      $region55: #{tpu_custom_call.1} parent=5 // pred_region
        %s358 = ssub.s32 %s23, 1
        %s359 = sand.u32 %s36, 1
        %s360 = scalar_lea.sflag [#allocation3], %s359
        %s361 = sand.u32 %s36, 1
        %s362 = smul.addr %s361, 32
        %s363 = scalar_lea.vmem [#allocation2], %s362
        // Predicated region
        $region57: #{tpu_custom_call.1} parent=55 // pred_check
          %p364 = pneg %p49
        $region58: #{tpu_custom_call.1} parent=55 // pred_check_branch
          %366 = sbr.rel (%p364) target = $region60
        $region59: #{tpu_custom_call.1} parent=55 // pred_region
          %368 = dma.done %s360, 512
        $region60: #{tpu_custom_call.1} parent=55 // pred_fallthru
          _
        // Predicated region
        $region61: #{tpu_custom_call.1} parent=55 // pred_check
          %p369 = pneg %p70
        $region62: #{tpu_custom_call.1} parent=55 // pred_check_branch
          %371 = sbr.rel (%p369) target = $region64
        $region63: #{tpu_custom_call.1} parent=55 // pred_region
          %373 = dma.done [#allocation6], 512
        $region64: #{tpu_custom_call.1} parent=55 // pred_fallthru
          _
        // Predicated region
        $region65: #{tpu_custom_call.1} parent=55 // pred_check
          %p374 = pneg %p112
        $region66: #{tpu_custom_call.1} parent=55 // pred_check_branch
          %376 = sbr.rel (%p374) target = $region68
        $region67: #{tpu_custom_call.1} parent=55 // pred_region
          %378 = dma.done [#allocation6], 512
        $region68: #{tpu_custom_call.1} parent=55 // pred_fallthru
          _
        // Predicated region
        $region69: #{tpu_custom_call.1} parent=55 // pred_check
          %p379 = pneg %p154
        $region70: #{tpu_custom_call.1} parent=55 // pred_check_branch
          %381 = sbr.rel (%p379) target = $region72
        $region71: #{tpu_custom_call.1} parent=55 // pred_region
          %383 = dma.done [#allocation9], 512
        $region72: #{tpu_custom_call.1} parent=55 // pred_fallthru
          _
        // Predicated region
        $region73: #{tpu_custom_call.1} parent=55 // pred_check
          %p384 = pneg %p196
        $region74: #{tpu_custom_call.1} parent=55 // pred_check_branch
          %386 = sbr.rel (%p384) target = $region76
        $region75: #{tpu_custom_call.1} parent=55 // pred_region
          %388 = dma.done [#allocation9], 512
        $region76: #{tpu_custom_call.1} parent=55 // pred_fallthru
          _
        %s389 = sand.u32 %s36, 1
        %s390 = scalar_lea.sflag [#allocation3], %s389
        %s391 = sand.u32 %s36, 1
        %s392 = smul.addr %s391, 32
        %s393 = scalar_lea.vmem [#allocation2], %s392
        %p394 = pneg %p49
        %p395 = pneg %p46
        %p396 = pneg %p70
        %p397 = pneg %p67
        %p398 = pneg %p91
        %p399 = pneg %p88
        %p400 = pneg %p112
        %p401 = pneg %p109
        %p402 = pneg %p133
        %p403 = pneg %p130
        %p404 = pneg %p154
        %p405 = pneg %p151
        %p406 = pneg %p175
        %p407 = pneg %p172
        %p408 = pneg %p196
        %p409 = pneg %p193
        %p410 = pneg %p217
        %p411 = pneg %p214
        %p412 = pneg %p243
        %p413 = pneg %p240
        %s414 = sand.u32 %s230, 1
        %s415 = scalar_lea.sflag [#allocation4], %s414
        %s416 = sand.u32 %s230, 1
        %s417 = smul.addr %s416, 32
        %s418 = scalar_lea.vmem [#allocation11], %s417
        %s419 = smul.u32 4, %s28
        %s420 = smul.u32 4, %s28
        %v422 = vld [vmem:[%s363] sm:$0xff]
        %v423 = vld [vmem:[%s363 + $0x8] sm:$0xff]
        %v424 = vld [vmem:[%s363 + $0x10] sm:$0xff]
        %v425 = vld [vmem:[%s363 + $0x18] sm:$0xff]
        %v426 = vld [vmem:[#allocation5] sm:$0xff]
        %v427 = vld [vmem:[#allocation5 + $0x8] sm:$0xff]
        %v428 = vld [vmem:[#allocation5 + $0x10] sm:$0xff]
        %v429 = vld [vmem:[#allocation5 + $0x18] sm:$0xff]
        %v430 = vld [vmem:[%s2] sm:$0x1]
        %v431 = vld [vmem:[#allocation7] sm:$0xff]
        %v432 = vld [vmem:[#allocation7 + $0x8] sm:$0xff]
        %v433 = vld [vmem:[#allocation7 + $0x10] sm:$0xff]
        %v434 = vld [vmem:[#allocation7 + $0x18] sm:$0xff]
        %v435 = vld [vmem:[%s4] sm:$0x1]
        %v436 = vld [vmem:[#allocation8] sm:$0xff]
        %v437 = vld [vmem:[#allocation8 + $0x8] sm:$0xff]
        %v438 = vld [vmem:[#allocation8 + $0x10] sm:$0xff]
        %v439 = vld [vmem:[#allocation8 + $0x18] sm:$0xff]
        %v440 = vld [vmem:[%s6] sm:$0x1]
        %v441 = vld [vmem:[#allocation10] sm:$0xff]
        %v442 = vld [vmem:[#allocation10 + $0x8] sm:$0xff]
        %v443 = vld [vmem:[#allocation10 + $0x10] sm:$0xff]
        %v444 = vld [vmem:[#allocation10 + $0x18] sm:$0xff]
        %v445 = vld [vmem:[%s8] sm:$0x1]
        %v446 = vpack.c.bf16 %v423, %v422
        %v447 = vpack.c.bf16 %v425, %v424
        %v448 = vpack.c.bf16 %v427, %v426
        %v449 = vpack.c.bf16 %v429, %v428
        %v451 = vperm.slane %v430, 0
        %vm453 = vcmask 261120
        %v455 = vsel %vm453, %v446, 0
        %v458 = vsel %vm453, %v447, 0
        %460 = vmatpush.bf16.msra.mxu0 0
        %461 = vmatpush.bf16.msra.mxu0 0
        %462 = vmatpush.bf16.msra.mxu0 0
        %463 = vmatpush.bf16.msra.mxu0 0
        %464 = vmatpush.bf16.msra.mxu0 0
        %465 = vmatpush.bf16.msra.mxu0 0
        %466 = vmatpush.bf16.msra.mxu0 %v449
        %467 = vmatpush.bf16.msra.mxu0 %v448
        %468 = vmatmul.bf16.gmra.mxu0 %v455
        %v469 = vpop.f32.mrf.mxu0
        %v470 = vadd.f32 %v451, %v469
        %v471 = vpop.f32.mrf.mxu0
        %v472 = vadd.f32 %v451, %v471
        %473 = vmatmul.bf16.gmra.mxu0 %v458
        %v474 = vpop.f32.mrf.mxu0
        %v475 = vadd.f32 %v451, %v474
        %v476 = vpop.f32.mrf.mxu0
        %v477 = vadd.f32 %v451, %v476
        %478 = vdwg.mxu0
        %v479 = vpack.c.bf16 %v432, %v431
        %v480 = vpack.c.bf16 %v434, %v433
        %v482 = vperm.slane %v435, 0
        %484 = vmatpush.bf16.msra.mxu0 0
        %485 = vmatpush.bf16.msra.mxu0 0
        %486 = vmatpush.bf16.msra.mxu0 0
        %487 = vmatpush.bf16.msra.mxu0 0
        %488 = vmatpush.bf16.msra.mxu0 0
        %489 = vmatpush.bf16.msra.mxu0 0
        %490 = vmatpush.bf16.msra.mxu0 %v480
        %491 = vmatpush.bf16.msra.mxu0 %v479
        %492 = vmatmul.bf16.gmra.mxu0 %v455
        %v493 = vpop.f32.mrf.mxu0
        %v494 = vadd.f32 %v482, %v493
        %v495 = vpop.f32.mrf.mxu0
        %v496 = vadd.f32 %v482, %v495
        %497 = vmatmul.bf16.gmra.mxu0 %v458
        %v498 = vpop.f32.mrf.mxu0
        %v499 = vadd.f32 %v482, %v498
        %v500 = vpop.f32.mrf.mxu0
        %v501 = vadd.f32 %v482, %v500
        %502 = vdwg.mxu0
        %v503 = vpack.c.bf16 %v437, %v436
        %v504 = vpack.c.bf16 %v439, %v438
        %v506 = vperm.slane %v440, 0
        %508 = vmatpush.bf16.msra.mxu0 0
        %509 = vmatpush.bf16.msra.mxu0 0
        %510 = vmatpush.bf16.msra.mxu0 0
        %511 = vmatpush.bf16.msra.mxu0 0
        %512 = vmatpush.bf16.msra.mxu0 0
        %513 = vmatpush.bf16.msra.mxu0 0
        %514 = vmatpush.bf16.msra.mxu0 %v504
        %515 = vmatpush.bf16.msra.mxu0 %v503
        %516 = vmatmul.bf16.gmra.mxu0 %v455
        %v517 = vpop.f32.mrf.mxu0
        %v518 = vadd.f32 %v506, %v517
        %v519 = vpop.f32.mrf.mxu0
        %v520 = vadd.f32 %v506, %v519
        %521 = vmatmul.bf16.gmra.mxu0 %v458
        %v522 = vpop.f32.mrf.mxu0
        %v523 = vadd.f32 %v506, %v522
        %v524 = vpop.f32.mrf.mxu0
        %v525 = vadd.f32 %v506, %v524
        %526 = vdwg.mxu0
        %v527 = vpack.c.bf16 %v470, %v470
        %v528 = vpack.c.bf16 %v472, %v472
        %v529 = vpack.c.bf16 %v475, %v475
        %v530 = vpack.c.bf16 %v477, %v477
        %v531 = vpack.c.bf16 %v494, %v494
        %v532 = vpack.c.bf16 %v496, %v496
        %v533 = vpack.c.bf16 %v499, %v499
        %v534 = vpack.c.bf16 %v501, %v501
        %v535 = vpack.c.bf16 %v518, %v518
        %v536 = vpack.c.bf16 %v520, %v520
        %v537 = vpack.c.bf16 %v523, %v523
        %v538 = vpack.c.bf16 %v525, %v525
        %vm539 = vcmask 130048
        %v541 = vsel %vm539, %v527, 0
        %v544 = vsel %vm539, %v531, 0
        %546 = vmatpush.bf16.xpose.msra.mxu0 0
        %547 = vmatpush.bf16.xpose.msra.mxu0 0
        %548 = vmatpush.bf16.xpose.msra.mxu0 0
        %549 = vmatpush.bf16.xpose.msra.mxu0 0
        %550 = vmatpush.bf16.xpose.msra.mxu0 0
        %551 = vmatpush.bf16.xpose.msra.mxu0 0
        %552 = vmatpush.bf16.xpose.msra.mxu0 0
        %553 = vmatpush.bf16.xpose.msra.mxu0 %v544
        %554 = vmatmul.bf16.gmra.mxu0 %v541
        %v555 = vpop.f32.mrf.mxu0
        %v556 = vadd.f32 0.0, %v555
        %v557 = vpop.f32.mrf.mxu0
        %558 = vdwg.mxu0
        %v560 = vsel %vm539, %v528, 0
        %v563 = vsel %vm539, %v532, 0
        %565 = vmatpush.bf16.xpose.msra.mxu0 0
        %566 = vmatpush.bf16.xpose.msra.mxu0 0
        %567 = vmatpush.bf16.xpose.msra.mxu0 0
        %568 = vmatpush.bf16.xpose.msra.mxu0 0
        %569 = vmatpush.bf16.xpose.msra.mxu0 0
        %570 = vmatpush.bf16.xpose.msra.mxu0 0
        %571 = vmatpush.bf16.xpose.msra.mxu0 0
        %572 = vmatpush.bf16.xpose.msra.mxu0 %v563
        %573 = vmatmul.bf16.gmra.mxu0 %v560
        %v574 = vpop.f32.mrf.mxu0
        %v575 = vadd.f32 0.0, %v574
        %v576 = vpop.f32.mrf.mxu0
        %577 = vdwg.mxu0
        %v579 = vsel %vm539, %v529, 0
        %v582 = vsel %vm539, %v533, 0
        %584 = vmatpush.bf16.xpose.msra.mxu0 0
        %585 = vmatpush.bf16.xpose.msra.mxu0 0
        %586 = vmatpush.bf16.xpose.msra.mxu0 0
        %587 = vmatpush.bf16.xpose.msra.mxu0 0
        %588 = vmatpush.bf16.xpose.msra.mxu0 0
        %589 = vmatpush.bf16.xpose.msra.mxu0 0
        %590 = vmatpush.bf16.xpose.msra.mxu0 0
        %591 = vmatpush.bf16.xpose.msra.mxu0 %v582
        %592 = vmatmul.bf16.gmra.mxu0 %v579
        %v593 = vpop.f32.mrf.mxu0
        %v594 = vadd.f32 0.0, %v593
        %v595 = vpop.f32.mrf.mxu0
        %596 = vdwg.mxu0
        %v598 = vsel %vm539, %v530, 0
        %v601 = vsel %vm539, %v534, 0
        %603 = vmatpush.bf16.xpose.msra.mxu0 0
        %604 = vmatpush.bf16.xpose.msra.mxu0 0
        %605 = vmatpush.bf16.xpose.msra.mxu0 0
        %606 = vmatpush.bf16.xpose.msra.mxu0 0
        %607 = vmatpush.bf16.xpose.msra.mxu0 0
        %608 = vmatpush.bf16.xpose.msra.mxu0 0
        %609 = vmatpush.bf16.xpose.msra.mxu0 0
        %610 = vmatpush.bf16.xpose.msra.mxu0 %v601
        %611 = vmatmul.bf16.gmra.mxu0 %v598
        %v612 = vpop.f32.mrf.mxu0
        %v613 = vadd.f32 0.0, %v612
        %v614 = vpop.f32.mrf.mxu0
        %615 = vdwg.mxu0
        %v616 = vmul.f32 %v556, 0.25
        %v617 = vmul.f32 %v575, 0.25
        %v618 = vmul.f32 %v594, 0.25
        %v619 = vmul.f32 %v613, 0.25
        %vm620 = vcmask 64512
        %v621 = vsel %vm620, %v616, -inf
        %622 = vmax.xlane.f32.xlu0 %v621
        %v623 = vpop.xlane.xlu0 %622
        %v624 = vsel %vm620, %v617, -inf
        %625 = vmax.xlane.f32.xlu0 %v624
        %v626 = vpop.xlane.xlu0 %625
        %v627 = vsel %vm620, %v618, -inf
        %628 = vmax.xlane.f32.xlu0 %v627
        %v629 = vpop.xlane.xlu0 %628
        %v630 = vsel %vm620, %v619, -inf
        %631 = vmax.xlane.f32.xlu0 %v630
        %v632 = vpop.xlane.xlu0 %631
        %v633 = vsub.f32 %v616, %v623
        %v634 = vsub.f32 %v617, %v626
        %v635 = vsub.f32 %v618, %v629
        %v636 = vsub.f32 %v619, %v632
        %v637 = vmul.f32 %v633, 1.442695
        %v638 = vpow.pop %v637
        %v639 = vmul.f32 %v634, 1.442695
        %v640 = vpow.pop %v639
        %v641 = vmul.f32 %v635, 1.442695
        %v642 = vpow.pop %v641
        %v643 = vmul.f32 %v636, 1.442695
        %v644 = vpow.pop %v643
        %v645 = vsel %vm620, %v638, 0.0
        %646 = vadd.xlane.f32.xlu0 %v645
        %v647 = vpop.xlane.xlu0 %646
        %v648 = vsel %vm620, %v640, 0.0
        %649 = vadd.xlane.f32.xlu0 %v648
        %v650 = vpop.xlane.xlu0 %649
        %v651 = vsel %vm620, %v642, 0.0
        %652 = vadd.xlane.f32.xlu0 %v651
        %v653 = vpop.xlane.xlu0 %652
        %v654 = vsel %vm620, %v644, 0.0
        %655 = vadd.xlane.f32.xlu0 %v654
        %v656 = vpop.xlane.xlu0 %655
        %v657 = vrcp.pop %v647
        %v658 = vrcp.pop %v650
        %v659 = vrcp.pop %v653
        %v660 = vrcp.pop %v656
        %v661 = vmul.f32 %v638, %v657
        %v662 = vmul.f32 %v640, %v658
        %v663 = vmul.f32 %v642, %v659
        %v664 = vmul.f32 %v644, %v660
        %v665 = vpack.c.bf16 %v661, %v661
        %v666 = vpack.c.bf16 %v662, %v662
        %v667 = vpack.c.bf16 %v663, %v663
        %v668 = vpack.c.bf16 %v664, %v664
        %v670 = vsel %vm620, %v665, 0
        %vm672 = vcmask 1043456
        %v674 = vsel %vm672, %v535, 0
        %676 = vmatpush.bf16.msra.mxu0 0
        %677 = vmatpush.bf16.msra.mxu0 0
        %678 = vmatpush.bf16.msra.mxu0 0
        %679 = vmatpush.bf16.msra.mxu0 0
        %680 = vmatpush.bf16.msra.mxu0 0
        %681 = vmatpush.bf16.msra.mxu0 0
        %682 = vmatpush.bf16.msra.mxu0 0
        %683 = vmatpush.bf16.msra.mxu0 %v674
        %684 = vmatmul.bf16.gmra.mxu0 %v670
        %v685 = vpop.f32.mrf.mxu0
        %v686 = vadd.f32 0.0, %v685
        %v687 = vpop.f32.mrf.mxu0
        %688 = vdwg.mxu0
        %v690 = vsel %vm620, %v666, 0
        %v693 = vsel %vm672, %v536, 0
        %695 = vmatpush.bf16.msra.mxu0 0
        %696 = vmatpush.bf16.msra.mxu0 0
        %697 = vmatpush.bf16.msra.mxu0 0
        %698 = vmatpush.bf16.msra.mxu0 0
        %699 = vmatpush.bf16.msra.mxu0 0
        %700 = vmatpush.bf16.msra.mxu0 0
        %701 = vmatpush.bf16.msra.mxu0 0
        %702 = vmatpush.bf16.msra.mxu0 %v693
        %703 = vmatmul.bf16.gmra.mxu0 %v690
        %v704 = vpop.f32.mrf.mxu0
        %v705 = vadd.f32 0.0, %v704
        %v706 = vpop.f32.mrf.mxu0
        %707 = vdwg.mxu0
        %v709 = vsel %vm620, %v667, 0
        %v712 = vsel %vm672, %v537, 0
        %714 = vmatpush.bf16.msra.mxu0 0
        %715 = vmatpush.bf16.msra.mxu0 0
        %716 = vmatpush.bf16.msra.mxu0 0
        %717 = vmatpush.bf16.msra.mxu0 0
        %718 = vmatpush.bf16.msra.mxu0 0
        %719 = vmatpush.bf16.msra.mxu0 0
        %720 = vmatpush.bf16.msra.mxu0 0
        %721 = vmatpush.bf16.msra.mxu0 %v712
        %722 = vmatmul.bf16.gmra.mxu0 %v709
        %v723 = vpop.f32.mrf.mxu0
        %v724 = vadd.f32 0.0, %v723
        %v725 = vpop.f32.mrf.mxu0
        %726 = vdwg.mxu0
        %v728 = vsel %vm620, %v668, 0
        %v731 = vsel %vm672, %v538, 0
        %733 = vmatpush.bf16.msra.mxu0 0
        %734 = vmatpush.bf16.msra.mxu0 0
        %735 = vmatpush.bf16.msra.mxu0 0
        %736 = vmatpush.bf16.msra.mxu0 0
        %737 = vmatpush.bf16.msra.mxu0 0
        %738 = vmatpush.bf16.msra.mxu0 0
        %739 = vmatpush.bf16.msra.mxu0 0
        %740 = vmatpush.bf16.msra.mxu0 %v731
        %741 = vmatmul.bf16.gmra.mxu0 %v728
        %v742 = vpop.f32.mrf.mxu0
        %v743 = vadd.f32 0.0, %v742
        %v744 = vpop.f32.mrf.mxu0
        %745 = vdwg.mxu0
        %v747 = vunpack.c.l.b16 %v527
        %v748 = vpack.c.b16 %v747, %v747
        %749 = vrot.lane.b32.xlu0 %v748, 112
        %v750 = vpop.permute.xlu0 %749
        %v752 = vunpack.c.l.b16 %v531
        %v753 = vpack.c.b16 %v752, %v752
        %754 = vrot.lane.b32.xlu0 %v753, 112
        %v755 = vpop.permute.xlu0 %754
        %v757 = vsel %vm539, %v750, 0
        %v760 = vsel %vm539, %v755, 0
        %762 = vmatpush.bf16.xpose.msra.mxu0 0
        %763 = vmatpush.bf16.xpose.msra.mxu0 0
        %764 = vmatpush.bf16.xpose.msra.mxu0 0
        %765 = vmatpush.bf16.xpose.msra.mxu0 0
        %766 = vmatpush.bf16.xpose.msra.mxu0 0
        %767 = vmatpush.bf16.xpose.msra.mxu0 0
        %768 = vmatpush.bf16.xpose.msra.mxu0 0
        %769 = vmatpush.bf16.xpose.msra.mxu0 %v760
        %770 = vmatmul.bf16.gmra.mxu0 %v757
        %v771 = vpop.f32.mrf.mxu0
        %v772 = vadd.f32 0.0, %v771
        %v773 = vpop.f32.mrf.mxu0
        %774 = vdwg.mxu0
        %v776 = vunpack.c.l.b16 %v528
        %v777 = vpack.c.b16 %v776, %v776
        %778 = vrot.lane.b32.xlu0 %v777, 112
        %v779 = vpop.permute.xlu0 %778
        %v781 = vunpack.c.l.b16 %v532
        %v782 = vpack.c.b16 %v781, %v781
        %783 = vrot.lane.b32.xlu0 %v782, 112
        %v784 = vpop.permute.xlu0 %783
        %v786 = vsel %vm539, %v779, 0
        %v789 = vsel %vm539, %v784, 0
        %791 = vmatpush.bf16.xpose.msra.mxu0 0
        %792 = vmatpush.bf16.xpose.msra.mxu0 0
        %793 = vmatpush.bf16.xpose.msra.mxu0 0
        %794 = vmatpush.bf16.xpose.msra.mxu0 0
        %795 = vmatpush.bf16.xpose.msra.mxu0 0
        %796 = vmatpush.bf16.xpose.msra.mxu0 0
        %797 = vmatpush.bf16.xpose.msra.mxu0 0
        %798 = vmatpush.bf16.xpose.msra.mxu0 %v789
        %799 = vmatmul.bf16.gmra.mxu0 %v786
        %v800 = vpop.f32.mrf.mxu0
        %v801 = vadd.f32 0.0, %v800
        %v802 = vpop.f32.mrf.mxu0
        %803 = vdwg.mxu0
        %v805 = vunpack.c.l.b16 %v529
        %v806 = vpack.c.b16 %v805, %v805
        %807 = vrot.lane.b32.xlu0 %v806, 112
        %v808 = vpop.permute.xlu0 %807
        %v810 = vunpack.c.l.b16 %v533
        %v811 = vpack.c.b16 %v810, %v810
        %812 = vrot.lane.b32.xlu0 %v811, 112
        %v813 = vpop.permute.xlu0 %812
        %v815 = vsel %vm539, %v808, 0
        %v818 = vsel %vm539, %v813, 0
        %820 = vmatpush.bf16.xpose.msra.mxu0 0
        %821 = vmatpush.bf16.xpose.msra.mxu0 0
        %822 = vmatpush.bf16.xpose.msra.mxu0 0
        %823 = vmatpush.bf16.xpose.msra.mxu0 0
        %824 = vmatpush.bf16.xpose.msra.mxu0 0
        %825 = vmatpush.bf16.xpose.msra.mxu0 0
        %826 = vmatpush.bf16.xpose.msra.mxu0 0
        %827 = vmatpush.bf16.xpose.msra.mxu0 %v818
        %828 = vmatmul.bf16.gmra.mxu0 %v815
        %v829 = vpop.f32.mrf.mxu0
        %v830 = vadd.f32 0.0, %v829
        %v831 = vpop.f32.mrf.mxu0
        %832 = vdwg.mxu0
        %v834 = vunpack.c.l.b16 %v530
        %v835 = vpack.c.b16 %v834, %v834
        %836 = vrot.lane.b32.xlu0 %v835, 112
        %v837 = vpop.permute.xlu0 %836
        %v839 = vunpack.c.l.b16 %v534
        %v840 = vpack.c.b16 %v839, %v839
        %841 = vrot.lane.b32.xlu0 %v840, 112
        %v842 = vpop.permute.xlu0 %841
        %v844 = vsel %vm539, %v837, 0
        %v847 = vsel %vm539, %v842, 0
        %849 = vmatpush.bf16.xpose.msra.mxu0 0
        %850 = vmatpush.bf16.xpose.msra.mxu0 0
        %851 = vmatpush.bf16.xpose.msra.mxu0 0
        %852 = vmatpush.bf16.xpose.msra.mxu0 0
        %853 = vmatpush.bf16.xpose.msra.mxu0 0
        %854 = vmatpush.bf16.xpose.msra.mxu0 0
        %855 = vmatpush.bf16.xpose.msra.mxu0 0
        %856 = vmatpush.bf16.xpose.msra.mxu0 %v847
        %857 = vmatmul.bf16.gmra.mxu0 %v844
        %v858 = vpop.f32.mrf.mxu0
        %v859 = vadd.f32 0.0, %v858
        %v860 = vpop.f32.mrf.mxu0
        %861 = vdwg.mxu0
        %v862 = vmul.f32 %v772, 0.25
        %v863 = vmul.f32 %v801, 0.25
        %v864 = vmul.f32 %v830, 0.25
        %v865 = vmul.f32 %v859, 0.25
        %v866 = vsel %vm620, %v862, -inf
        %867 = vmax.xlane.f32.xlu0 %v866
        %v868 = vpop.xlane.xlu0 %867
        %v869 = vsel %vm620, %v863, -inf
        %870 = vmax.xlane.f32.xlu0 %v869
        %v871 = vpop.xlane.xlu0 %870
        %v872 = vsel %vm620, %v864, -inf
        %873 = vmax.xlane.f32.xlu0 %v872
        %v874 = vpop.xlane.xlu0 %873
        %v875 = vsel %vm620, %v865, -inf
        %876 = vmax.xlane.f32.xlu0 %v875
        %v877 = vpop.xlane.xlu0 %876
        %v878 = vsub.f32 %v862, %v868
        %v879 = vsub.f32 %v863, %v871
        %v880 = vsub.f32 %v864, %v874
        %v881 = vsub.f32 %v865, %v877
        %v882 = vmul.f32 %v878, 1.442695
        %v883 = vpow.pop %v882
        %v884 = vmul.f32 %v879, 1.442695
        %v885 = vpow.pop %v884
        %v886 = vmul.f32 %v880, 1.442695
        %v887 = vpow.pop %v886
        %v888 = vmul.f32 %v881, 1.442695
        %v889 = vpow.pop %v888
        %v890 = vsel %vm620, %v883, 0.0
        %891 = vadd.xlane.f32.xlu0 %v890
        %v892 = vpop.xlane.xlu0 %891
        %v893 = vsel %vm620, %v885, 0.0
        %894 = vadd.xlane.f32.xlu0 %v893
        %v895 = vpop.xlane.xlu0 %894
        %v896 = vsel %vm620, %v887, 0.0
        %897 = vadd.xlane.f32.xlu0 %v896
        %v898 = vpop.xlane.xlu0 %897
        %v899 = vsel %vm620, %v889, 0.0
        %900 = vadd.xlane.f32.xlu0 %v899
        %v901 = vpop.xlane.xlu0 %900
        %v902 = vrcp.pop %v892
        %v903 = vrcp.pop %v895
        %v904 = vrcp.pop %v898
        %v905 = vrcp.pop %v901
        %v906 = vmul.f32 %v883, %v902
        %v907 = vmul.f32 %v885, %v903
        %v908 = vmul.f32 %v887, %v904
        %v909 = vmul.f32 %v889, %v905
        %v910 = vpack.c.bf16 %v906, %v906
        %v911 = vpack.c.bf16 %v907, %v907
        %v912 = vpack.c.bf16 %v908, %v908
        %v913 = vpack.c.bf16 %v909, %v909
        %v915 = vunpack.c.l.b16 %v535
        %v916 = vpack.c.b16 %v915, %v915
        %917 = vrot.lane.b32.xlu0 %v916, 112
        %v918 = vpop.permute.xlu0 %917
        %v920 = vsel %vm620, %v910, 0
        %v923 = vsel %vm672, %v918, 0
        %925 = vmatpush.bf16.msra.mxu0 0
        %926 = vmatpush.bf16.msra.mxu0 0
        %927 = vmatpush.bf16.msra.mxu0 0
        %928 = vmatpush.bf16.msra.mxu0 0
        %929 = vmatpush.bf16.msra.mxu0 0
        %930 = vmatpush.bf16.msra.mxu0 0
        %931 = vmatpush.bf16.msra.mxu0 0
        %932 = vmatpush.bf16.msra.mxu0 %v923
        %933 = vmatmul.bf16.gmra.mxu0 %v920
        %v934 = vpop.f32.mrf.mxu0
        %v935 = vadd.f32 0.0, %v934
        %v936 = vpop.f32.mrf.mxu0
        %937 = vdwg.mxu0
        %v939 = vunpack.c.l.b16 %v536
        %v940 = vpack.c.b16 %v939, %v939
        %941 = vrot.lane.b32.xlu0 %v940, 112
        %v942 = vpop.permute.xlu0 %941
        %v944 = vsel %vm620, %v911, 0
        %v947 = vsel %vm672, %v942, 0
        %949 = vmatpush.bf16.msra.mxu0 0
        %950 = vmatpush.bf16.msra.mxu0 0
        %951 = vmatpush.bf16.msra.mxu0 0
        %952 = vmatpush.bf16.msra.mxu0 0
        %953 = vmatpush.bf16.msra.mxu0 0
        %954 = vmatpush.bf16.msra.mxu0 0
        %955 = vmatpush.bf16.msra.mxu0 0
        %956 = vmatpush.bf16.msra.mxu0 %v947
        %957 = vmatmul.bf16.gmra.mxu0 %v944
        %v958 = vpop.f32.mrf.mxu0
        %v959 = vadd.f32 0.0, %v958
        %v960 = vpop.f32.mrf.mxu0
        %961 = vdwg.mxu0
        %v963 = vunpack.c.l.b16 %v537
        %v964 = vpack.c.b16 %v963, %v963
        %965 = vrot.lane.b32.xlu0 %v964, 112
        %v966 = vpop.permute.xlu0 %965
        %v968 = vsel %vm620, %v912, 0
        %v971 = vsel %vm672, %v966, 0
        %973 = vmatpush.bf16.msra.mxu0 0
        %974 = vmatpush.bf16.msra.mxu0 0
        %975 = vmatpush.bf16.msra.mxu0 0
        %976 = vmatpush.bf16.msra.mxu0 0
        %977 = vmatpush.bf16.msra.mxu0 0
        %978 = vmatpush.bf16.msra.mxu0 0
        %979 = vmatpush.bf16.msra.mxu0 0
        %980 = vmatpush.bf16.msra.mxu0 %v971
        %981 = vmatmul.bf16.gmra.mxu0 %v968
        %v982 = vpop.f32.mrf.mxu0
        %v983 = vadd.f32 0.0, %v982
        %v984 = vpop.f32.mrf.mxu0
        %985 = vdwg.mxu0
        %v987 = vunpack.c.l.b16 %v538
        %v988 = vpack.c.b16 %v987, %v987
        %989 = vrot.lane.b32.xlu0 %v988, 112
        %v990 = vpop.permute.xlu0 %989
        %v992 = vsel %vm620, %v913, 0
        %v995 = vsel %vm672, %v990, 0
        %997 = vmatpush.bf16.msra.mxu0 0
        %998 = vmatpush.bf16.msra.mxu0 0
        %999 = vmatpush.bf16.msra.mxu0 0
        %1000 = vmatpush.bf16.msra.mxu0 0
        %1001 = vmatpush.bf16.msra.mxu0 0
        %1002 = vmatpush.bf16.msra.mxu0 0
        %1003 = vmatpush.bf16.msra.mxu0 0
        %1004 = vmatpush.bf16.msra.mxu0 %v995
        %1005 = vmatmul.bf16.gmra.mxu0 %v992
        %v1006 = vpop.f32.mrf.mxu0
        %v1007 = vadd.f32 0.0, %v1006
        %v1008 = vpop.f32.mrf.mxu0
        %1009 = vdwg.mxu0
        %1014 = vrot.lane.b32.xlu0 %v935, 16
        %v1015 = vpop.permute.xlu0 %1014
        %1016 = vrot.lane.b32.xlu0 %v959, 16
        %v1017 = vpop.permute.xlu0 %1016
        %1018 = vrot.lane.b32.xlu0 %v983, 16
        %v1019 = vpop.permute.xlu0 %1018
        %1020 = vrot.lane.b32.xlu0 %v1007, 16
        %v1021 = vpop.permute.xlu0 %1020
        %v1026 = vsel %vm539, %v686, %v1015
        %v1027 = vsel %vm539, %v705, %v1017
        %v1028 = vsel %vm539, %v724, %v1019
        %v1029 = vsel %vm539, %v743, %v1021
        %v1030 = vpack.c.bf16 %v1027, %v1026
        %v1031 = vpack.c.bf16 %v1029, %v1028
        %v1032 = vpack.c.bf16 %v442, %v441
        %v1033 = vpack.c.bf16 %v444, %v443
        %v1035 = vperm.slane %v445, 0
        %v1038 = vsel %vm453, %v1030, 0
        %v1041 = vsel %vm453, %v1031, 0
        %1043 = vmatpush.bf16.msra.mxu0 0
        %1044 = vmatpush.bf16.msra.mxu0 0
        %1045 = vmatpush.bf16.msra.mxu0 0
        %1046 = vmatpush.bf16.msra.mxu0 0
        %1047 = vmatpush.bf16.msra.mxu0 0
        %1048 = vmatpush.bf16.msra.mxu0 0
        %1049 = vmatpush.bf16.msra.mxu0 %v1033
        %1050 = vmatpush.bf16.msra.mxu0 %v1032
        %1051 = vmatmul.bf16.gmra.mxu0 %v1038
        %v1052 = vpop.f32.mrf.mxu0
        %v1053 = vadd.f32 %v1035, %v1052
        %v1054 = vpop.f32.mrf.mxu0
        %v1055 = vadd.f32 %v1035, %v1054
        %1056 = vmatmul.bf16.gmra.mxu0 %v1041
        %v1057 = vpop.f32.mrf.mxu0
        %v1058 = vadd.f32 %v1035, %v1057
        %v1059 = vpop.f32.mrf.mxu0
        %v1060 = vadd.f32 %v1035, %v1059
        %1061 = vdwg.mxu0
        %1062 = vst.msk [vmem:[%s418] sm:$0xff] %vm453, %v1053
        %1063 = vst.msk [vmem:[%s418 + $0x8] sm:$0xff] %vm453, %v1055
        %1064 = vst.msk [vmem:[%s418 + $0x10] sm:$0xff] %vm453, %v1058
        %1065 = vst.msk [vmem:[%s418 + $0x18] sm:$0xff] %vm453, %v1060
        %s1066 = sand.u32 %s230, 1
        %s1067 = scalar_lea.sflag [#allocation4], %s1066
        %s1068 = sand.u32 %s230, 1
        %s1069 = smul.addr %s1068, 32
        %s1070 = scalar_lea.vmem [#allocation11], %s1069
        // Predicated region
        $region77: #{tpu_custom_call.1} parent=55 // pred_check
          %p1071 = pneg %p240
        $region78: #{tpu_custom_call.1} parent=55 // pred_check_branch
          %1073 = sbr.rel (%p1071) target = $region80
        $region79: #{tpu_custom_call.1} parent=55 // pred_region
          %s1074 = smul.u32 4, %s28
          %1076 = vsyncadd %s1067, 0
          %s1077 = smul.addr %s1074, 8
          %s1078 = scalar_lea.hbm %s9, %s1077
          %s1079 = sshll.u32 %s1070, 4
          %s1080 = int_to_ptr.vmem [resolvable:$true] %s1079
          %s1081 = sshll.u32 %s1078, 4
          %s1082 = int_to_ptr.hbm [resolvable:$true] %s1081
          %1087 = dma.vmem_to_hbm [thread:$0]  %s1080, 512, %s1082, %s1067, 128, 128, 8
        $region80: #{tpu_custom_call.1} parent=55 // pred_fallthru
          _
      $region56: #{tpu_custom_call.1} parent=5 // pred_fallthru
        _
      %p1088 = scmp.le.s32.totalorder 2, %s23
      // Predicated region
      $region81: #{tpu_custom_call.1} parent=5 // pred_check
        %p1089 = pneg %p1088
      $region82: #{tpu_custom_call.1} parent=5 // pred_check_branch
        %1091 = sbr.rel (%p1089) target = $region84
      $region83: #{tpu_custom_call.1} parent=5 // pred_region
        %s1092 = ssub.s32 %s23, 2
        // Predicated region
        $region85: #{tpu_custom_call.1} parent=83 // pred_check
          %p1093 = pneg %p246
        $region86: #{tpu_custom_call.1} parent=83 // pred_check_branch
          %1095 = sbr.rel (%p1093) target = $region88
        $region87: #{tpu_custom_call.1} parent=83 // pred_region
          %s1096 = sand.u32 %s231, 1
          %s1097 = scalar_lea.sflag [#allocation4], %s1096
          %s1098 = sand.u32 %s231, 1
          %s1099 = smul.addr %s1098, 32
          %s1100 = scalar_lea.vmem [#allocation11], %s1099
          %1102 = dma.done %s1097, 512
        $region88: #{tpu_custom_call.1} parent=83 // pred_fallthru
          _
      $region84: #{tpu_custom_call.1} parent=5 // pred_fallthru
        _
    $region6: #{tpu_custom_call.1} parent=1 // loop_footer
      %s27 = sadd.s32 1, %s23
    $region7: #{tpu_custom_call.1} parent=1 // loop_footer_branch
      %22 = sbr.rel target = $region3
    $region8: #{tpu_custom_call.1} parent=1 // loop_exit
      _
    %1103 = vsyncpa [#allocation3], 1
    %s1104 = scalar_lea.sflag [#allocation3], 1
    %1105 = vsyncpa %s1104, 1
    %1106 = vsyncpa [#allocation6], 1
    %1107 = vsyncpa [#allocation9], 1
    %1108 = vsyncpa [#allocation4], 1
    %s1109 = scalar_lea.sflag [#allocation4], 1
    %1110 = vsyncpa %s1109, 1

</llo_original>
